<compile_context>
chip_gen: v7x
topology: tpu7x:2x2x1
jax: 0.10.0
libtpu: 0.0.40
codegen_flags: <defaults>
</compile_context>

<pallas_src>
import functools
import math

import jax
import jax.numpy as jnp
from jax.experimental import pallas as pl
from jax.experimental.pallas import tpu as pltpu

# ---------------- small synthetic BERT config ----------------
VOCAB_SIZE = 100
TYPE_VOCAB_SIZE = 2
MAX_POS = 16
HIDDEN = 32
NUM_HEADS = 2
HEAD_DIM = HIDDEN // NUM_HEADS
INTERMEDIATE = 64
NUM_LAYERS = 2
NUM_LABELS = 5
LN_EPS = 1e-12
LANE = 128  # lane width; logits / parameter slabs are padded to this

# ---- packed-slab row layout (static offsets used inside the kernel) ----
# weight slab (bf16, shape (W_ROWS, LANE)); all row offsets are multiples of 16 (aligned):
W_QKV = 0                        # HIDDEN rows,        lanes [0, 3*HIDDEN)
W_O = HIDDEN                     # HIDDEN rows,        lanes [0, HIDDEN)
W_FF1 = 2 * HIDDEN               # HIDDEN rows,        lanes [0, INTERMEDIATE)
W_FF2 = 3 * HIDDEN               # INTERMEDIATE rows,  lanes [0, HIDDEN)
W_LAYER_ROWS = 3 * HIDDEN + INTERMEDIATE
W_POOL = NUM_LAYERS * W_LAYER_ROWS
W_CLS = W_POOL + HIDDEN          # HIDDEN rows, lanes [0, LANE) (zero-padded past NUM_LABELS)
W_ROWS = W_CLS + HIDDEN

# bias / LayerNorm slab (f32, shape (B_ROWS, LANE)), one vector per row:
B_EMB_G, B_EMB_B = 0, 1
B_LAYER0 = 2
B_PER_LAYER = 8                  # bqkv, bo, ln1_g, ln1_b, b1, b2, ln2_g, ln2_b
B_POOL = B_LAYER0 + NUM_LAYERS * B_PER_LAYER
B_CLS = B_POOL + 1
B_ROWS = B_CLS + 1


# ---------------- fused forward kernel (whole batch, grid-less) ----------------
def _bert_fwd_kernel(emb_ref, mask_ref, w_ref, b_ref, o_ref, *, batch, seq):
    f32, bf16 = jnp.float32, jnp.bfloat16

    def bias(row, width):                       # (1, width) f32, static slice
        return b_ref[row:row + 1, 0:width]

    def weight(row, nrows, width):              # (nrows, width) bf16, static aligned slice
        return w_ref[row:row + nrows, 0:width]

    def layer_norm(y, g, b):
        mu = jnp.mean(y, axis=-1, keepdims=True)
        var = jnp.mean((y - mu) ** 2, axis=-1, keepdims=True)
        return (y - mu) * jax.lax.rsqrt(var + LN_EPS) * g + b

    def gelu(y):
        # TODO(synk): HF BERT uses exact (erf) GELU; tanh approximation used for Mosaic-safe lowering.
        return 0.5 * y * (1.0 + jnp.tanh(0.7978845608028654 * (y + 0.044715 * y * y * y)))

    x = emb_ref[...].astype(f32)                # (B*S, H)
    mask = mask_ref[...]                        # (B*S, B*S) additive mask, loaded once (hoisted)

    # embedding LayerNorm
    x = layer_norm(x, bias(B_EMB_G, HIDDEN), bias(B_EMB_B, HIDDEN))

    scale = 1.0 / math.sqrt(HEAD_DIM)
    for l in range(NUM_LAYERS):
        wbase = l * W_LAYER_ROWS
        bbase = B_LAYER0 + l * B_PER_LAYER

        # ---- fused QKV projection: one (B*S,H)@(H,3H) matmul ----
        qkv = jnp.dot(x.astype(bf16), weight(wbase + W_QKV, HIDDEN, 3 * HIDDEN),
                      preferred_element_type=f32) + bias(bbase + 0, 3 * HIDDEN)

        # ---- per-head attention; batch folded into M, block-diag mask isolates batches ----
        ctxs = []
        for h in range(NUM_HEADS):
            q = qkv[:, h * HEAD_DIM:(h + 1) * HEAD_DIM]
            k = qkv[:, HIDDEN + h * HEAD_DIM:HIDDEN + (h + 1) * HEAD_DIM]
            v = qkv[:, 2 * HIDDEN + h * HEAD_DIM:2 * HIDDEN + (h + 1) * HEAD_DIM]
            # contract last axes directly -> no in-kernel transpose of K
            s = jax.lax.dot_general(q.astype(bf16), k.astype(bf16),
                                    (((1,), (1,)), ((), ())),
                                    preferred_element_type=f32) * scale + mask    # (B*S, B*S)
            s = s - jnp.max(s, axis=-1, keepdims=True)
            p = jnp.exp(s)
            p = p * pl.reciprocal(jnp.sum(p, axis=-1, keepdims=True), approx=True)
            ctxs.append(jnp.dot(p.astype(bf16), v.astype(bf16),
                                preferred_element_type=f32))                      # (B*S, Dh)
        ctx = jnp.concatenate(ctxs, axis=-1)                                      # (B*S, H)

        # ---- fused output projection: single (B*S,H)@(H,H) matmul ----
        attn = jnp.dot(ctx.astype(bf16), weight(wbase + W_O, HIDDEN, HIDDEN),
                       preferred_element_type=f32) + bias(bbase + 1, HIDDEN)
        x = layer_norm(attn + x, bias(bbase + 2, HIDDEN), bias(bbase + 3, HIDDEN))

        # ---- feed-forward ----
        ff = gelu(jnp.dot(x.astype(bf16), weight(wbase + W_FF1, HIDDEN, INTERMEDIATE),
                          preferred_element_type=f32) + bias(bbase + 4, INTERMEDIATE))
        ff = jnp.dot(ff.astype(bf16), weight(wbase + W_FF2, INTERMEDIATE, HIDDEN),
                     preferred_element_type=f32) + bias(bbase + 5, HIDDEN)
        x = layer_norm(ff + x, bias(bbase + 6, HIDDEN), bias(bbase + 7, HIDDEN))

    # ---- pooler on each batch element's CLS token + classifier (lane-dense store) ----
    cls_rows = jnp.concatenate([x[b * seq:b * seq + 1, :] for b in range(batch)], axis=0)  # (B, H)
    pooled = jnp.tanh(jnp.dot(cls_rows.astype(bf16), weight(W_POOL, HIDDEN, HIDDEN),
                              preferred_element_type=f32) + bias(B_POOL, HIDDEN))          # (B, H)
    logits = jnp.dot(pooled.astype(bf16), weight(W_CLS, HIDDEN, LANE),
                     preferred_element_type=f32) + bias(B_CLS, LANE)                       # (B, 128)
    o_ref[...] = logits.astype(o_ref.dtype)


def bert_fused_forward(packed, emb_flat, mask_full, batch, seq):
    vmem = pl.BlockSpec(memory_space=pltpu.MemorySpace.VMEM)
    logits_pad = pl.pallas_call(
        functools.partial(_bert_fwd_kernel, batch=batch, seq=seq),
        out_shape=jax.ShapeDtypeStruct((batch, LANE), jnp.float32),
        in_specs=[vmem, vmem, vmem, vmem],
        out_specs=vmem,
    )(emb_flat, mask_full, packed["w_slab"], packed["b_slab"])
    return logits_pad[:, :NUM_LABELS]


def entity_typing_forward(packed, input_ids, attention_mask, token_type_ids):
    """Equivalent of EntityTyping.forward: returns classification logits (B, NUM_LABELS)."""
    b, s = input_ids.shape
    # embedding lookup (data-dependent gather) stays in XLA; everything else is the fused kernel
    emb = (
        jnp.take(packed["word_emb"], input_ids, axis=0)
        + packed["pos_emb"][None, :s, :]
        + jnp.take(packed["type_emb"], token_type_ids, axis=0)
    )
    emb_flat = emb.reshape(b * s, HIDDEN)
    # additive mask: HF-style key padding (-10000) + block-diagonal batch isolation (-1e9)
    key_add = ((1.0 - attention_mask.astype(jnp.float32)) * -10000.0).reshape(-1)   # (B*S,)
    qb = jnp.repeat(jnp.arange(b), s)
    same = qb[:, None] == qb[None, :]
    mask_full = jnp.where(same, key_add[None, :], jnp.float32(-1e9))                # (B*S, B*S)
    return bert_fused_forward(packed, emb_flat, mask_full, b, s)


# ---------------- deterministic parameter init (same math as the per-op version) ----------------
def init_params(key):
    std = 0.02
    keys = iter(jax.random.split(key, 64))

    def w(shape):
        return jax.random.normal(next(keys), shape, jnp.float32) * std

    params = {
        "word_emb": w((VOCAB_SIZE, HIDDEN)),
        "pos_emb": w((MAX_POS, HIDDEN)),
        "type_emb": w((TYPE_VOCAB_SIZE, HIDDEN)),
        "emb_ln_g": jnp.ones((HIDDEN,), jnp.float32),
        "emb_ln_b": jnp.zeros((HIDDEN,), jnp.float32),
        "pool_w": w((HIDDEN, HIDDEN)),
        "pool_b": jnp.zeros((HIDDEN,), jnp.float32),
        "cls_w": w((HIDDEN, NUM_LABELS)),
        "cls_b": jnp.zeros((NUM_LABELS,), jnp.float32),
        "layers": [],
    }
    for _ in range(NUM_LAYERS):
        params["layers"].append(
            {
                "wq": w((HIDDEN, HIDDEN)), "bq": jnp.zeros((HIDDEN,), jnp.float32),
                "wk": w((HIDDEN, HIDDEN)), "bk": jnp.zeros((HIDDEN,), jnp.float32),
                "wv": w((HIDDEN, HIDDEN)), "bv": jnp.zeros((HIDDEN,), jnp.float32),
                "wo": w((HIDDEN, HIDDEN)), "bo": jnp.zeros((HIDDEN,), jnp.float32),
                "ln1_g": jnp.ones((HIDDEN,), jnp.float32),
                "ln1_b": jnp.zeros((HIDDEN,), jnp.float32),
                "w1": w((HIDDEN, INTERMEDIATE)),
                "b1": jnp.zeros((INTERMEDIATE,), jnp.float32),
                "w2": w((INTERMEDIATE, HIDDEN)),
                "b2": jnp.zeros((HIDDEN,), jnp.float32),
                "ln2_g": jnp.ones((HIDDEN,), jnp.float32),
                "ln2_b": jnp.zeros((HIDDEN,), jnp.float32),
            }
        )
    return params


def pack_params(params):
    """Pack all weights into one bf16 lane-dense slab and all bias/LN vectors into one f32
    slab, so the kernel takes 4 operands total and addresses parameters via static,
    sublane-aligned ref slices."""

    def pad_lanes(m):  # (r, c) -> (r, LANE) zero-padded
        r, c = m.shape
        return jnp.zeros((r, LANE), jnp.float32).at[:, :c].set(m)

    def row(v):        # (n,) -> (1, LANE) zero-padded
        return jnp.zeros((1, LANE), jnp.float32).at[0, :v.shape[0]].set(v)

    wrows = []
    for lp in params["layers"]:
        wqkv = jnp.concatenate([lp["wq"], lp["wk"], lp["wv"]], axis=1)     # (H, 3H)
        wrows += [pad_lanes(wqkv), pad_lanes(lp["wo"]),
                  pad_lanes(lp["w1"]), pad_lanes(lp["w2"])]
    wrows += [pad_lanes(params["pool_w"]), pad_lanes(params["cls_w"])]
    w_slab = jnp.concatenate(wrows, axis=0).astype(jnp.bfloat16)           # (W_ROWS, 128)
    assert w_slab.shape == (W_ROWS, LANE)

    brows = [row(params["emb_ln_g"]), row(params["emb_ln_b"])]
    for lp in params["layers"]:
        bqkv = jnp.concatenate([lp["bq"], lp["bk"], lp["bv"]])             # (3H,)
        brows += [row(bqkv), row(lp["bo"]), row(lp["ln1_g"]), row(lp["ln1_b"]),
                  row(lp["b1"]), row(lp["b2"]), row(lp["ln2_g"]), row(lp["ln2_b"])]
    brows += [row(params["pool_b"]), row(params["cls_b"])]
    b_slab = jnp.concatenate(brows, axis=0)                                # (B_ROWS, 128)
    assert b_slab.shape == (B_ROWS, LANE)

    return {
        "word_emb": params["word_emb"],
        "pos_emb": params["pos_emb"],
        "type_emb": params["type_emb"],
        "w_slab": w_slab,
        "b_slab": b_slab,
    }


if __name__ == "__main__":
    key = jax.random.PRNGKey(0)
    k_param, k_ids = jax.random.split(key)

    B, S = 2, 8
    params = init_params(k_param)
    packed = pack_params(params)

    input_ids = jax.random.randint(k_ids, (B, S), 0, VOCAB_SIZE, dtype=jnp.int32)
    attention_mask = jnp.ones((B, S), jnp.int32).at[1, 6:].set(0)  # second example padded
    token_type_ids = jnp.zeros((B, S), jnp.int32)

    fwd = jax.jit(entity_typing_forward)
    logits = fwd(packed, input_ids, attention_mask, token_type_ids)
    jax.block_until_ready(logits)
    assert logits.shape == (B, NUM_LABELS) and jnp.all(jnp.isfinite(logits))
    print("KERNEL_OK")
</pallas_src>

<mosaic_0001>
module attributes {stable_mosaic.version = 11 : i64} {
  func.func @_bert_fwd_kernel(%arg0: memref<16x32xf32, #tpu.memory_space<vmem>>, %arg1: memref<16x16xf32, #tpu.memory_space<vmem>>, %arg2: memref<384x128xbf16, #tpu.memory_space<vmem>>, %arg3: memref<20x128xf32, #tpu.memory_space<vmem>>, %arg4: memref<2x128xf32, #tpu.memory_space<vmem>>) attributes {dimension_semantics = [], scalar_prefetch = 0 : i64, scratch_operands = 0 : i64, tpu.core_type = #tpu.core_type<tc>} {
    %c0 = arith.constant 0 : index
    %c0_0 = arith.constant 0 : index
    %0 = vector.load %arg0[%c0, %c0_0] : memref<16x32xf32, #tpu.memory_space<vmem>>, vector<16x32xf32>
    %c0_1 = arith.constant 0 : index
    %c0_2 = arith.constant 0 : index
    %1 = vector.load %arg1[%c0_1, %c0_2] : memref<16x16xf32, #tpu.memory_space<vmem>>, vector<16x16xf32>
    %c0_3 = arith.constant 0 : index
    %c0_4 = arith.constant 0 : index
    %2 = vector.load %arg3[%c0_3, %c0_4] : memref<20x128xf32, #tpu.memory_space<vmem>>, vector<1x32xf32>
    %c1 = arith.constant 1 : index
    %c0_5 = arith.constant 0 : index
    %3 = vector.load %arg3[%c1, %c0_5] : memref<20x128xf32, #tpu.memory_space<vmem>>, vector<1x32xf32>
    %cst = arith.constant dense<0.000000e+00> : vector<16xf32>
    %4 = vector.multi_reduction <add>, %0, %cst [1] : vector<16x32xf32> to vector<16xf32>
    %5 = vector.shape_cast %4 : vector<16xf32> to vector<16x1xf32>
    %cst_6 = arith.constant 3.200000e+01 : f32
    %6 = vector.broadcast %cst_6 : f32 to vector<16x1xf32>
    %7 = arith.divf %5, %6 : vector<16x1xf32>
    %8 = vector.broadcast %7 : vector<16x1xf32> to vector<16x32xf32>
    %9 = arith.subf %0, %8 : vector<16x32xf32>
    %10 = arith.mulf %9, %9 : vector<16x32xf32>
    %cst_7 = arith.constant dense<0.000000e+00> : vector<16xf32>
    %11 = vector.multi_reduction <add>, %10, %cst_7 [1] : vector<16x32xf32> to vector<16xf32>
    %12 = vector.shape_cast %11 : vector<16xf32> to vector<16x1xf32>
    %cst_8 = arith.constant 3.200000e+01 : f32
    %13 = vector.broadcast %cst_8 : f32 to vector<16x1xf32>
    %14 = arith.divf %12, %13 : vector<16x1xf32>
    %15 = vector.broadcast %7 : vector<16x1xf32> to vector<16x32xf32>
    %16 = arith.subf %0, %15 : vector<16x32xf32>
    %cst_9 = arith.constant 9.99999996E-13 : f32
    %17 = vector.broadcast %cst_9 : f32 to vector<16x1xf32>
    %18 = arith.addf %14, %17 : vector<16x1xf32>
    %19 = math.rsqrt %18 : vector<16x1xf32>
    %20 = vector.broadcast %19 : vector<16x1xf32> to vector<16x32xf32>
    %21 = arith.mulf %16, %20 : vector<16x32xf32>
    %22 = vector.broadcast %2 : vector<1x32xf32> to vector<16x32xf32>
    %23 = arith.mulf %21, %22 : vector<16x32xf32>
    %24 = vector.broadcast %3 : vector<1x32xf32> to vector<16x32xf32>
    %25 = arith.addf %23, %24 : vector<16x32xf32>
    %26 = arith.truncf %25 : vector<16x32xf32> to vector<16x32xbf16>
    %c0_10 = arith.constant 0 : index
    %c0_11 = arith.constant 0 : index
    %27 = vector.load %arg2[%c0_10, %c0_11] : memref<384x128xbf16, #tpu.memory_space<vmem>>, vector<32x96xbf16>
    %cst_12 = arith.constant dense<0.000000e+00> : vector<16x96xf32>
    %28 = tpu.matmul %26, %27, %cst_12 {dimension_numbers = #tpu.dot_dimension_numbers<[1], [0], [0], [1], [0, 0, 1, 1], [], []>} : vector<16x32xbf16>, vector<32x96xbf16>, vector<16x96xf32> -> vector<16x96xf32>
    %c2 = arith.constant 2 : index
    %c0_13 = arith.constant 0 : index
    %29 = vector.load %arg3[%c2, %c0_13] : memref<20x128xf32, #tpu.memory_space<vmem>>, vector<1x96xf32>
    %30 = vector.broadcast %29 : vector<1x96xf32> to vector<16x96xf32>
    %31 = arith.addf %28, %30 : vector<16x96xf32>
    %32 = vector.extract_strided_slice %31 {offsets = [0, 0], sizes = [16, 16], strides = [1, 1]} : vector<16x96xf32> to vector<16x16xf32>
    %33 = vector.extract_strided_slice %31 {offsets = [0, 32], sizes = [16, 16], strides = [1, 1]} : vector<16x96xf32> to vector<16x16xf32>
    %34 = vector.extract_strided_slice %31 {offsets = [0, 64], sizes = [16, 16], strides = [1, 1]} : vector<16x96xf32> to vector<16x16xf32>
    %35 = arith.truncf %32 : vector<16x16xf32> to vector<16x16xbf16>
    %36 = arith.truncf %33 : vector<16x16xf32> to vector<16x16xbf16>
    %cst_14 = arith.constant dense<0.000000e+00> : vector<16x16xf32>
    %37 = tpu.matmul %35, %36, %cst_14 {dimension_numbers = #tpu.dot_dimension_numbers<[1], [1], [0], [0], [0, 0, 1, 0], [], []>} : vector<16x16xbf16>, vector<16x16xbf16>, vector<16x16xf32> -> vector<16x16xf32>
    %cst_15 = arith.constant 2.500000e-01 : f32
    %38 = vector.broadcast %cst_15 : f32 to vector<16x16xf32>
    %39 = arith.mulf %37, %38 : vector<16x16xf32>
    %40 = arith.addf %39, %1 : vector<16x16xf32>
    %cst_16 = arith.constant dense<0xFF800000> : vector<16xf32>
    %41 = vector.multi_reduction <maximumf>, %40, %cst_16 [1] : vector<16x16xf32> to vector<16xf32>
    %42 = vector.shape_cast %41 : vector<16xf32> to vector<16x1xf32>
    %43 = vector.broadcast %42 : vector<16x1xf32> to vector<16x16xf32>
    %44 = arith.subf %40, %43 : vector<16x16xf32>
    %45 = math.exp %44 : vector<16x16xf32>
    %cst_17 = arith.constant dense<0.000000e+00> : vector<16xf32>
    %46 = vector.multi_reduction <add>, %45, %cst_17 [1] : vector<16x16xf32> to vector<16xf32>
    %47 = vector.shape_cast %46 : vector<16xf32> to vector<16x1xf32>
    %48 = tpu.reciprocal %47 {approx = true} : vector<16x1xf32> -> vector<16x1xf32>
    %49 = vector.broadcast %48 : vector<16x1xf32> to vector<16x16xf32>
    %50 = arith.mulf %45, %49 : vector<16x16xf32>
    %51 = arith.truncf %50 : vector<16x16xf32> to vector<16x16xbf16>
    %52 = arith.truncf %34 : vector<16x16xf32> to vector<16x16xbf16>
    %cst_18 = arith.constant dense<0.000000e+00> : vector<16x16xf32>
    %53 = tpu.matmul %51, %52, %cst_18 {dimension_numbers = #tpu.dot_dimension_numbers<[1], [0], [0], [1], [0, 0, 1, 1], [], []>} : vector<16x16xbf16>, vector<16x16xbf16>, vector<16x16xf32> -> vector<16x16xf32>
    %54 = vector.extract_strided_slice %31 {offsets = [0, 16], sizes = [16, 16], strides = [1, 1]} : vector<16x96xf32> to vector<16x16xf32>
    %55 = vector.extract_strided_slice %31 {offsets = [0, 48], sizes = [16, 16], strides = [1, 1]} : vector<16x96xf32> to vector<16x16xf32>
    %56 = vector.extract_strided_slice %31 {offsets = [0, 80], sizes = [16, 16], strides = [1, 1]} : vector<16x96xf32> to vector<16x16xf32>
    %57 = arith.truncf %54 : vector<16x16xf32> to vector<16x16xbf16>
    %58 = arith.truncf %55 : vector<16x16xf32> to vector<16x16xbf16>
    %cst_19 = arith.constant dense<0.000000e+00> : vector<16x16xf32>
    %59 = tpu.matmul %57, %58, %cst_19 {dimension_numbers = #tpu.dot_dimension_numbers<[1], [1], [0], [0], [0, 0, 1, 0], [], []>} : vector<16x16xbf16>, vector<16x16xbf16>, vector<16x16xf32> -> vector<16x16xf32>
    %cst_20 = arith.constant 2.500000e-01 : f32
    %60 = vector.broadcast %cst_20 : f32 to vector<16x16xf32>
    %61 = arith.mulf %59, %60 : vector<16x16xf32>
    %62 = arith.addf %61, %1 : vector<16x16xf32>
    %cst_21 = arith.constant dense<0xFF800000> : vector<16xf32>
    %63 = vector.multi_reduction <maximumf>, %62, %cst_21 [1] : vector<16x16xf32> to vector<16xf32>
    %64 = vector.shape_cast %63 : vector<16xf32> to vector<16x1xf32>
    %65 = vector.broadcast %64 : vector<16x1xf32> to vector<16x16xf32>
    %66 = arith.subf %62, %65 : vector<16x16xf32>
    %67 = math.exp %66 : vector<16x16xf32>
    %cst_22 = arith.constant dense<0.000000e+00> : vector<16xf32>
    %68 = vector.multi_reduction <add>, %67, %cst_22 [1] : vector<16x16xf32> to vector<16xf32>
    %69 = vector.shape_cast %68 : vector<16xf32> to vector<16x1xf32>
    %70 = tpu.reciprocal %69 {approx = true} : vector<16x1xf32> -> vector<16x1xf32>
    %71 = vector.broadcast %70 : vector<16x1xf32> to vector<16x16xf32>
    %72 = arith.mulf %67, %71 : vector<16x16xf32>
    %73 = arith.truncf %72 : vector<16x16xf32> to vector<16x16xbf16>
    %74 = arith.truncf %56 : vector<16x16xf32> to vector<16x16xbf16>
    %cst_23 = arith.constant dense<0.000000e+00> : vector<16x16xf32>
    %75 = tpu.matmul %73, %74, %cst_23 {dimension_numbers = #tpu.dot_dimension_numbers<[1], [0], [0], [1], [0, 0, 1, 1], [], []>} : vector<16x16xbf16>, vector<16x16xbf16>, vector<16x16xf32> -> vector<16x16xf32>
    %76 = tpu.concatenate %53, %75 in 1 : vector<16x16xf32>, vector<16x16xf32> -> vector<16x32xf32>
    %77 = arith.truncf %76 : vector<16x32xf32> to vector<16x32xbf16>
    %c32 = arith.constant 32 : index
    %c0_24 = arith.constant 0 : index
    %78 = vector.load %arg2[%c32, %c0_24] : memref<384x128xbf16, #tpu.memory_space<vmem>>, vector<32x32xbf16>
    %cst_25 = arith.constant dense<0.000000e+00> : vector<16x32xf32>
    %79 = tpu.matmul %77, %78, %cst_25 {dimension_numbers = #tpu.dot_dimension_numbers<[1], [0], [0], [1], [0, 0, 1, 1], [], []>} : vector<16x32xbf16>, vector<32x32xbf16>, vector<16x32xf32> -> vector<16x32xf32>
    %c3 = arith.constant 3 : index
    %c0_26 = arith.constant 0 : index
    %80 = vector.load %arg3[%c3, %c0_26] : memref<20x128xf32, #tpu.memory_space<vmem>>, vector<1x32xf32>
    %81 = vector.broadcast %80 : vector<1x32xf32> to vector<16x32xf32>
    %82 = arith.addf %79, %81 : vector<16x32xf32>
    %83 = arith.addf %82, %25 : vector<16x32xf32>
    %c4 = arith.constant 4 : index
    %c0_27 = arith.constant 0 : index
    %84 = vector.load %arg3[%c4, %c0_27] : memref<20x128xf32, #tpu.memory_space<vmem>>, vector<1x32xf32>
    %c5 = arith.constant 5 : index
    %c0_28 = arith.constant 0 : index
    %85 = vector.load %arg3[%c5, %c0_28] : memref<20x128xf32, #tpu.memory_space<vmem>>, vector<1x32xf32>
    %cst_29 = arith.constant dense<0.000000e+00> : vector<16xf32>
    %86 = vector.multi_reduction <add>, %83, %cst_29 [1] : vector<16x32xf32> to vector<16xf32>
    %87 = vector.shape_cast %86 : vector<16xf32> to vector<16x1xf32>
    %cst_30 = arith.constant 3.200000e+01 : f32
    %88 = vector.broadcast %cst_30 : f32 to vector<16x1xf32>
    %89 = arith.divf %87, %88 : vector<16x1xf32>
    %90 = vector.broadcast %89 : vector<16x1xf32> to vector<16x32xf32>
    %91 = arith.subf %83, %90 : vector<16x32xf32>
    %92 = arith.mulf %91, %91 : vector<16x32xf32>
    %cst_31 = arith.constant dense<0.000000e+00> : vector<16xf32>
    %93 = vector.multi_reduction <add>, %92, %cst_31 [1] : vector<16x32xf32> to vector<16xf32>
    %94 = vector.shape_cast %93 : vector<16xf32> to vector<16x1xf32>
    %cst_32 = arith.constant 3.200000e+01 : f32
    %95 = vector.broadcast %cst_32 : f32 to vector<16x1xf32>
    %96 = arith.divf %94, %95 : vector<16x1xf32>
    %97 = vector.broadcast %89 : vector<16x1xf32> to vector<16x32xf32>
    %98 = arith.subf %83, %97 : vector<16x32xf32>
    %cst_33 = arith.constant 9.99999996E-13 : f32
    %99 = vector.broadcast %cst_33 : f32 to vector<16x1xf32>
    %100 = arith.addf %96, %99 : vector<16x1xf32>
    %101 = math.rsqrt %100 : vector<16x1xf32>
    %102 = vector.broadcast %101 : vector<16x1xf32> to vector<16x32xf32>
    %103 = arith.mulf %98, %102 : vector<16x32xf32>
    %104 = vector.broadcast %84 : vector<1x32xf32> to vector<16x32xf32>
    %105 = arith.mulf %103, %104 : vector<16x32xf32>
    %106 = vector.broadcast %85 : vector<1x32xf32> to vector<16x32xf32>
    %107 = arith.addf %105, %106 : vector<16x32xf32>
    %108 = arith.truncf %107 : vector<16x32xf32> to vector<16x32xbf16>
    %c64 = arith.constant 64 : index
    %c0_34 = arith.constant 0 : index
    %109 = vector.load %arg2[%c64, %c0_34] : memref<384x128xbf16, #tpu.memory_space<vmem>>, vector<32x64xbf16>
    %cst_35 = arith.constant dense<0.000000e+00> : vector<16x64xf32>
    %110 = tpu.matmul %108, %109, %cst_35 {dimension_numbers = #tpu.dot_dimension_numbers<[1], [0], [0], [1], [0, 0, 1, 1], [], []>} : vector<16x32xbf16>, vector<32x64xbf16>, vector<16x64xf32> -> vector<16x64xf32>
    %c6 = arith.constant 6 : index
    %c0_36 = arith.constant 0 : index
    %111 = vector.load %arg3[%c6, %c0_36] : memref<20x128xf32, #tpu.memory_space<vmem>>, vector<1x64xf32>
    %112 = vector.broadcast %111 : vector<1x64xf32> to vector<16x64xf32>
    %113 = arith.addf %110, %112 : vector<16x64xf32>
    %cst_37 = arith.constant 5.000000e-01 : f32
    %114 = vector.broadcast %cst_37 : f32 to vector<16x64xf32>
    %115 = arith.mulf %114, %113 : vector<16x64xf32>
    %cst_38 = arith.constant 4.471500e-02 : f32
    %116 = vector.broadcast %cst_38 : f32 to vector<16x64xf32>
    %117 = arith.mulf %116, %113 : vector<16x64xf32>
    %118 = arith.mulf %117, %113 : vector<16x64xf32>
    %119 = arith.mulf %118, %113 : vector<16x64xf32>
    %120 = arith.addf %113, %119 : vector<16x64xf32>
    %cst_39 = arith.constant 0.797884583 : f32
    %121 = vector.broadcast %cst_39 : f32 to vector<16x64xf32>
    %122 = arith.mulf %121, %120 : vector<16x64xf32>
    %123 = math.tanh %122 : vector<16x64xf32>
    %cst_40 = arith.constant 1.000000e+00 : f32
    %124 = vector.broadcast %cst_40 : f32 to vector<16x64xf32>
    %125 = arith.addf %124, %123 : vector<16x64xf32>
    %126 = arith.mulf %115, %125 : vector<16x64xf32>
    %127 = arith.truncf %126 : vector<16x64xf32> to vector<16x64xbf16>
    %c96 = arith.constant 96 : index
    %c0_41 = arith.constant 0 : index
    %128 = vector.load %arg2[%c96, %c0_41] : memref<384x128xbf16, #tpu.memory_space<vmem>>, vector<64x32xbf16>
    %cst_42 = arith.constant dense<0.000000e+00> : vector<16x32xf32>
    %129 = tpu.matmul %127, %128, %cst_42 {dimension_numbers = #tpu.dot_dimension_numbers<[1], [0], [0], [1], [0, 0, 1, 1], [], []>} : vector<16x64xbf16>, vector<64x32xbf16>, vector<16x32xf32> -> vector<16x32xf32>
    %c7 = arith.constant 7 : index
    %c0_43 = arith.constant 0 : index
    %130 = vector.load %arg3[%c7, %c0_43] : memref<20x128xf32, #tpu.memory_space<vmem>>, vector<1x32xf32>
    %131 = vector.broadcast %130 : vector<1x32xf32> to vector<16x32xf32>
    %132 = arith.addf %129, %131 : vector<16x32xf32>
    %133 = arith.addf %132, %107 : vector<16x32xf32>
    %c8 = arith.constant 8 : index
    %c0_44 = arith.constant 0 : index
    %134 = vector.load %arg3[%c8, %c0_44] : memref<20x128xf32, #tpu.memory_space<vmem>>, vector<1x32xf32>
    %c9 = arith.constant 9 : index
    %c0_45 = arith.constant 0 : index
    %135 = vector.load %arg3[%c9, %c0_45] : memref<20x128xf32, #tpu.memory_space<vmem>>, vector<1x32xf32>
    %cst_46 = arith.constant dense<0.000000e+00> : vector<16xf32>
    %136 = vector.multi_reduction <add>, %133, %cst_46 [1] : vector<16x32xf32> to vector<16xf32>
    %137 = vector.shape_cast %136 : vector<16xf32> to vector<16x1xf32>
    %cst_47 = arith.constant 3.200000e+01 : f32
    %138 = vector.broadcast %cst_47 : f32 to vector<16x1xf32>
    %139 = arith.divf %137, %138 : vector<16x1xf32>
    %140 = vector.broadcast %139 : vector<16x1xf32> to vector<16x32xf32>
    %141 = arith.subf %133, %140 : vector<16x32xf32>
    %142 = arith.mulf %141, %141 : vector<16x32xf32>
    %cst_48 = arith.constant dense<0.000000e+00> : vector<16xf32>
    %143 = vector.multi_reduction <add>, %142, %cst_48 [1] : vector<16x32xf32> to vector<16xf32>
    %144 = vector.shape_cast %143 : vector<16xf32> to vector<16x1xf32>
    %cst_49 = arith.constant 3.200000e+01 : f32
    %145 = vector.broadcast %cst_49 : f32 to vector<16x1xf32>
    %146 = arith.divf %144, %145 : vector<16x1xf32>
    %147 = vector.broadcast %139 : vector<16x1xf32> to vector<16x32xf32>
    %148 = arith.subf %133, %147 : vector<16x32xf32>
    %cst_50 = arith.constant 9.99999996E-13 : f32
    %149 = vector.broadcast %cst_50 : f32 to vector<16x1xf32>
    %150 = arith.addf %146, %149 : vector<16x1xf32>
    %151 = math.rsqrt %150 : vector<16x1xf32>
    %152 = vector.broadcast %151 : vector<16x1xf32> to vector<16x32xf32>
    %153 = arith.mulf %148, %152 : vector<16x32xf32>
    %154 = vector.broadcast %134 : vector<1x32xf32> to vector<16x32xf32>
    %155 = arith.mulf %153, %154 : vector<16x32xf32>
    %156 = vector.broadcast %135 : vector<1x32xf32> to vector<16x32xf32>
    %157 = arith.addf %155, %156 : vector<16x32xf32>
    %158 = arith.truncf %157 : vector<16x32xf32> to vector<16x32xbf16>
    %c160 = arith.constant 160 : index
    %c0_51 = arith.constant 0 : index
    %159 = vector.load %arg2[%c160, %c0_51] : memref<384x128xbf16, #tpu.memory_space<vmem>>, vector<32x96xbf16>
    %cst_52 = arith.constant dense<0.000000e+00> : vector<16x96xf32>
    %160 = tpu.matmul %158, %159, %cst_52 {dimension_numbers = #tpu.dot_dimension_numbers<[1], [0], [0], [1], [0, 0, 1, 1], [], []>} : vector<16x32xbf16>, vector<32x96xbf16>, vector<16x96xf32> -> vector<16x96xf32>
    %c10 = arith.constant 10 : index
    %c0_53 = arith.constant 0 : index
    %161 = vector.load %arg3[%c10, %c0_53] : memref<20x128xf32, #tpu.memory_space<vmem>>, vector<1x96xf32>
    %162 = vector.broadcast %161 : vector<1x96xf32> to vector<16x96xf32>
    %163 = arith.addf %160, %162 : vector<16x96xf32>
    %164 = vector.extract_strided_slice %163 {offsets = [0, 0], sizes = [16, 16], strides = [1, 1]} : vector<16x96xf32> to vector<16x16xf32>
    %165 = vector.extract_strided_slice %163 {offsets = [0, 32], sizes = [16, 16], strides = [1, 1]} : vector<16x96xf32> to vector<16x16xf32>
    %166 = vector.extract_strided_slice %163 {offsets = [0, 64], sizes = [16, 16], strides = [1, 1]} : vector<16x96xf32> to vector<16x16xf32>
    %167 = arith.truncf %164 : vector<16x16xf32> to vector<16x16xbf16>
    %168 = arith.truncf %165 : vector<16x16xf32> to vector<16x16xbf16>
    %cst_54 = arith.constant dense<0.000000e+00> : vector<16x16xf32>
    %169 = tpu.matmul %167, %168, %cst_54 {dimension_numbers = #tpu.dot_dimension_numbers<[1], [1], [0], [0], [0, 0, 1, 0], [], []>} : vector<16x16xbf16>, vector<16x16xbf16>, vector<16x16xf32> -> vector<16x16xf32>
    %cst_55 = arith.constant 2.500000e-01 : f32
    %170 = vector.broadcast %cst_55 : f32 to vector<16x16xf32>
    %171 = arith.mulf %169, %170 : vector<16x16xf32>
    %172 = arith.addf %171, %1 : vector<16x16xf32>
    %cst_56 = arith.constant dense<0xFF800000> : vector<16xf32>
    %173 = vector.multi_reduction <maximumf>, %172, %cst_56 [1] : vector<16x16xf32> to vector<16xf32>
    %174 = vector.shape_cast %173 : vector<16xf32> to vector<16x1xf32>
    %175 = vector.broadcast %174 : vector<16x1xf32> to vector<16x16xf32>
    %176 = arith.subf %172, %175 : vector<16x16xf32>
    %177 = math.exp %176 : vector<16x16xf32>
    %cst_57 = arith.constant dense<0.000000e+00> : vector<16xf32>
    %178 = vector.multi_reduction <add>, %177, %cst_57 [1] : vector<16x16xf32> to vector<16xf32>
    %179 = vector.shape_cast %178 : vector<16xf32> to vector<16x1xf32>
    %180 = tpu.reciprocal %179 {approx = true} : vector<16x1xf32> -> vector<16x1xf32>
    %181 = vector.broadcast %180 : vector<16x1xf32> to vector<16x16xf32>
    %182 = arith.mulf %177, %181 : vector<16x16xf32>
    %183 = arith.truncf %182 : vector<16x16xf32> to vector<16x16xbf16>
    %184 = arith.truncf %166 : vector<16x16xf32> to vector<16x16xbf16>
    %cst_58 = arith.constant dense<0.000000e+00> : vector<16x16xf32>
    %185 = tpu.matmul %183, %184, %cst_58 {dimension_numbers = #tpu.dot_dimension_numbers<[1], [0], [0], [1], [0, 0, 1, 1], [], []>} : vector<16x16xbf16>, vector<16x16xbf16>, vector<16x16xf32> -> vector<16x16xf32>
    %186 = vector.extract_strided_slice %163 {offsets = [0, 16], sizes = [16, 16], strides = [1, 1]} : vector<16x96xf32> to vector<16x16xf32>
    %187 = vector.extract_strided_slice %163 {offsets = [0, 48], sizes = [16, 16], strides = [1, 1]} : vector<16x96xf32> to vector<16x16xf32>
    %188 = vector.extract_strided_slice %163 {offsets = [0, 80], sizes = [16, 16], strides = [1, 1]} : vector<16x96xf32> to vector<16x16xf32>
    %189 = arith.truncf %186 : vector<16x16xf32> to vector<16x16xbf16>
    %190 = arith.truncf %187 : vector<16x16xf32> to vector<16x16xbf16>
    %cst_59 = arith.constant dense<0.000000e+00> : vector<16x16xf32>
    %191 = tpu.matmul %189, %190, %cst_59 {dimension_numbers = #tpu.dot_dimension_numbers<[1], [1], [0], [0], [0, 0, 1, 0], [], []>} : vector<16x16xbf16>, vector<16x16xbf16>, vector<16x16xf32> -> vector<16x16xf32>
    %cst_60 = arith.constant 2.500000e-01 : f32
    %192 = vector.broadcast %cst_60 : f32 to vector<16x16xf32>
    %193 = arith.mulf %191, %192 : vector<16x16xf32>
    %194 = arith.addf %193, %1 : vector<16x16xf32>
    %cst_61 = arith.constant dense<0xFF800000> : vector<16xf32>
    %195 = vector.multi_reduction <maximumf>, %194, %cst_61 [1] : vector<16x16xf32> to vector<16xf32>
    %196 = vector.shape_cast %195 : vector<16xf32> to vector<16x1xf32>
    %197 = vector.broadcast %196 : vector<16x1xf32> to vector<16x16xf32>
    %198 = arith.subf %194, %197 : vector<16x16xf32>
    %199 = math.exp %198 : vector<16x16xf32>
    %cst_62 = arith.constant dense<0.000000e+00> : vector<16xf32>
    %200 = vector.multi_reduction <add>, %199, %cst_62 [1] : vector<16x16xf32> to vector<16xf32>
    %201 = vector.shape_cast %200 : vector<16xf32> to vector<16x1xf32>
    %202 = tpu.reciprocal %201 {approx = true} : vector<16x1xf32> -> vector<16x1xf32>
    %203 = vector.broadcast %202 : vector<16x1xf32> to vector<16x16xf32>
    %204 = arith.mulf %199, %203 : vector<16x16xf32>
    %205 = arith.truncf %204 : vector<16x16xf32> to vector<16x16xbf16>
    %206 = arith.truncf %188 : vector<16x16xf32> to vector<16x16xbf16>
    %cst_63 = arith.constant dense<0.000000e+00> : vector<16x16xf32>
    %207 = tpu.matmul %205, %206, %cst_63 {dimension_numbers = #tpu.dot_dimension_numbers<[1], [0], [0], [1], [0, 0, 1, 1], [], []>} : vector<16x16xbf16>, vector<16x16xbf16>, vector<16x16xf32> -> vector<16x16xf32>
    %208 = tpu.concatenate %185, %207 in 1 : vector<16x16xf32>, vector<16x16xf32> -> vector<16x32xf32>
    %209 = arith.truncf %208 : vector<16x32xf32> to vector<16x32xbf16>
    %c192 = arith.constant 192 : index
    %c0_64 = arith.constant 0 : index
    %210 = vector.load %arg2[%c192, %c0_64] : memref<384x128xbf16, #tpu.memory_space<vmem>>, vector<32x32xbf16>
    %cst_65 = arith.constant dense<0.000000e+00> : vector<16x32xf32>
    %211 = tpu.matmul %209, %210, %cst_65 {dimension_numbers = #tpu.dot_dimension_numbers<[1], [0], [0], [1], [0, 0, 1, 1], [], []>} : vector<16x32xbf16>, vector<32x32xbf16>, vector<16x32xf32> -> vector<16x32xf32>
    %c11 = arith.constant 11 : index
    %c0_66 = arith.constant 0 : index
    %212 = vector.load %arg3[%c11, %c0_66] : memref<20x128xf32, #tpu.memory_space<vmem>>, vector<1x32xf32>
    %213 = vector.broadcast %212 : vector<1x32xf32> to vector<16x32xf32>
    %214 = arith.addf %211, %213 : vector<16x32xf32>
    %215 = arith.addf %214, %157 : vector<16x32xf32>
    %c12 = arith.constant 12 : index
    %c0_67 = arith.constant 0 : index
    %216 = vector.load %arg3[%c12, %c0_67] : memref<20x128xf32, #tpu.memory_space<vmem>>, vector<1x32xf32>
    %c13 = arith.constant 13 : index
    %c0_68 = arith.constant 0 : index
    %217 = vector.load %arg3[%c13, %c0_68] : memref<20x128xf32, #tpu.memory_space<vmem>>, vector<1x32xf32>
    %cst_69 = arith.constant dense<0.000000e+00> : vector<16xf32>
    %218 = vector.multi_reduction <add>, %215, %cst_69 [1] : vector<16x32xf32> to vector<16xf32>
    %219 = vector.shape_cast %218 : vector<16xf32> to vector<16x1xf32>
    %cst_70 = arith.constant 3.200000e+01 : f32
    %220 = vector.broadcast %cst_70 : f32 to vector<16x1xf32>
    %221 = arith.divf %219, %220 : vector<16x1xf32>
    %222 = vector.broadcast %221 : vector<16x1xf32> to vector<16x32xf32>
    %223 = arith.subf %215, %222 : vector<16x32xf32>
    %224 = arith.mulf %223, %223 : vector<16x32xf32>
    %cst_71 = arith.constant dense<0.000000e+00> : vector<16xf32>
    %225 = vector.multi_reduction <add>, %224, %cst_71 [1] : vector<16x32xf32> to vector<16xf32>
    %226 = vector.shape_cast %225 : vector<16xf32> to vector<16x1xf32>
    %cst_72 = arith.constant 3.200000e+01 : f32
    %227 = vector.broadcast %cst_72 : f32 to vector<16x1xf32>
    %228 = arith.divf %226, %227 : vector<16x1xf32>
    %229 = vector.broadcast %221 : vector<16x1xf32> to vector<16x32xf32>
    %230 = arith.subf %215, %229 : vector<16x32xf32>
    %cst_73 = arith.constant 9.99999996E-13 : f32
    %231 = vector.broadcast %cst_73 : f32 to vector<16x1xf32>
    %232 = arith.addf %228, %231 : vector<16x1xf32>
    %233 = math.rsqrt %232 : vector<16x1xf32>
    %234 = vector.broadcast %233 : vector<16x1xf32> to vector<16x32xf32>
    %235 = arith.mulf %230, %234 : vector<16x32xf32>
    %236 = vector.broadcast %216 : vector<1x32xf32> to vector<16x32xf32>
    %237 = arith.mulf %235, %236 : vector<16x32xf32>
    %238 = vector.broadcast %217 : vector<1x32xf32> to vector<16x32xf32>
    %239 = arith.addf %237, %238 : vector<16x32xf32>
    %240 = arith.truncf %239 : vector<16x32xf32> to vector<16x32xbf16>
    %c224 = arith.constant 224 : index
    %c0_74 = arith.constant 0 : index
    %241 = vector.load %arg2[%c224, %c0_74] : memref<384x128xbf16, #tpu.memory_space<vmem>>, vector<32x64xbf16>
    %cst_75 = arith.constant dense<0.000000e+00> : vector<16x64xf32>
    %242 = tpu.matmul %240, %241, %cst_75 {dimension_numbers = #tpu.dot_dimension_numbers<[1], [0], [0], [1], [0, 0, 1, 1], [], []>} : vector<16x32xbf16>, vector<32x64xbf16>, vector<16x64xf32> -> vector<16x64xf32>
    %c14 = arith.constant 14 : index
    %c0_76 = arith.constant 0 : index
    %243 = vector.load %arg3[%c14, %c0_76] : memref<20x128xf32, #tpu.memory_space<vmem>>, vector<1x64xf32>
    %244 = vector.broadcast %243 : vector<1x64xf32> to vector<16x64xf32>
    %245 = arith.addf %242, %244 : vector<16x64xf32>
    %cst_77 = arith.constant 5.000000e-01 : f32
    %246 = vector.broadcast %cst_77 : f32 to vector<16x64xf32>
    %247 = arith.mulf %246, %245 : vector<16x64xf32>
    %cst_78 = arith.constant 4.471500e-02 : f32
    %248 = vector.broadcast %cst_78 : f32 to vector<16x64xf32>
    %249 = arith.mulf %248, %245 : vector<16x64xf32>
    %250 = arith.mulf %249, %245 : vector<16x64xf32>
    %251 = arith.mulf %250, %245 : vector<16x64xf32>
    %252 = arith.addf %245, %251 : vector<16x64xf32>
    %cst_79 = arith.constant 0.797884583 : f32
    %253 = vector.broadcast %cst_79 : f32 to vector<16x64xf32>
    %254 = arith.mulf %253, %252 : vector<16x64xf32>
    %255 = math.tanh %254 : vector<16x64xf32>
    %cst_80 = arith.constant 1.000000e+00 : f32
    %256 = vector.broadcast %cst_80 : f32 to vector<16x64xf32>
    %257 = arith.addf %256, %255 : vector<16x64xf32>
    %258 = arith.mulf %247, %257 : vector<16x64xf32>
    %259 = arith.truncf %258 : vector<16x64xf32> to vector<16x64xbf16>
    %c256 = arith.constant 256 : index
    %c0_81 = arith.constant 0 : index
    %260 = vector.load %arg2[%c256, %c0_81] : memref<384x128xbf16, #tpu.memory_space<vmem>>, vector<64x32xbf16>
    %cst_82 = arith.constant dense<0.000000e+00> : vector<16x32xf32>
    %261 = tpu.matmul %259, %260, %cst_82 {dimension_numbers = #tpu.dot_dimension_numbers<[1], [0], [0], [1], [0, 0, 1, 1], [], []>} : vector<16x64xbf16>, vector<64x32xbf16>, vector<16x32xf32> -> vector<16x32xf32>
    %c15 = arith.constant 15 : index
    %c0_83 = arith.constant 0 : index
    %262 = vector.load %arg3[%c15, %c0_83] : memref<20x128xf32, #tpu.memory_space<vmem>>, vector<1x32xf32>
    %263 = vector.broadcast %262 : vector<1x32xf32> to vector<16x32xf32>
    %264 = arith.addf %261, %263 : vector<16x32xf32>
    %265 = arith.addf %264, %239 : vector<16x32xf32>
    %c16 = arith.constant 16 : index
    %c0_84 = arith.constant 0 : index
    %266 = vector.load %arg3[%c16, %c0_84] : memref<20x128xf32, #tpu.memory_space<vmem>>, vector<1x32xf32>
    %c17 = arith.constant 17 : index
    %c0_85 = arith.constant 0 : index
    %267 = vector.load %arg3[%c17, %c0_85] : memref<20x128xf32, #tpu.memory_space<vmem>>, vector<1x32xf32>
    %cst_86 = arith.constant dense<0.000000e+00> : vector<16xf32>
    %268 = vector.multi_reduction <add>, %265, %cst_86 [1] : vector<16x32xf32> to vector<16xf32>
    %269 = vector.shape_cast %268 : vector<16xf32> to vector<16x1xf32>
    %cst_87 = arith.constant 3.200000e+01 : f32
    %270 = vector.broadcast %cst_87 : f32 to vector<16x1xf32>
    %271 = arith.divf %269, %270 : vector<16x1xf32>
    %272 = vector.broadcast %271 : vector<16x1xf32> to vector<16x32xf32>
    %273 = arith.subf %265, %272 : vector<16x32xf32>
    %274 = arith.mulf %273, %273 : vector<16x32xf32>
    %cst_88 = arith.constant dense<0.000000e+00> : vector<16xf32>
    %275 = vector.multi_reduction <add>, %274, %cst_88 [1] : vector<16x32xf32> to vector<16xf32>
    %276 = vector.shape_cast %275 : vector<16xf32> to vector<16x1xf32>
    %cst_89 = arith.constant 3.200000e+01 : f32
    %277 = vector.broadcast %cst_89 : f32 to vector<16x1xf32>
    %278 = arith.divf %276, %277 : vector<16x1xf32>
    %279 = vector.broadcast %271 : vector<16x1xf32> to vector<16x32xf32>
    %280 = arith.subf %265, %279 : vector<16x32xf32>
    %cst_90 = arith.constant 9.99999996E-13 : f32
    %281 = vector.broadcast %cst_90 : f32 to vector<16x1xf32>
    %282 = arith.addf %278, %281 : vector<16x1xf32>
    %283 = math.rsqrt %282 : vector<16x1xf32>
    %284 = vector.broadcast %283 : vector<16x1xf32> to vector<16x32xf32>
    %285 = arith.mulf %280, %284 : vector<16x32xf32>
    %286 = vector.broadcast %266 : vector<1x32xf32> to vector<16x32xf32>
    %287 = arith.mulf %285, %286 : vector<16x32xf32>
    %288 = vector.broadcast %267 : vector<1x32xf32> to vector<16x32xf32>
    %289 = arith.addf %287, %288 : vector<16x32xf32>
    %290 = vector.extract_strided_slice %289 {offsets = [0, 0], sizes = [1, 32], strides = [1, 1]} : vector<16x32xf32> to vector<1x32xf32>
    %291 = vector.extract_strided_slice %289 {offsets = [8, 0], sizes = [1, 32], strides = [1, 1]} : vector<16x32xf32> to vector<1x32xf32>
    %292 = tpu.concatenate %290, %291 in 0 : vector<1x32xf32>, vector<1x32xf32> -> vector<2x32xf32>
    %293 = arith.truncf %292 : vector<2x32xf32> to vector<2x32xbf16>
    %c320 = arith.constant 320 : index
    %c0_91 = arith.constant 0 : index
    %294 = vector.load %arg2[%c320, %c0_91] : memref<384x128xbf16, #tpu.memory_space<vmem>>, vector<32x32xbf16>
    %cst_92 = arith.constant dense<0.000000e+00> : vector<2x32xf32>
    %295 = tpu.matmul %293, %294, %cst_92 {dimension_numbers = #tpu.dot_dimension_numbers<[1], [0], [0], [1], [0, 0, 1, 1], [], []>} : vector<2x32xbf16>, vector<32x32xbf16>, vector<2x32xf32> -> vector<2x32xf32>
    %c18 = arith.constant 18 : index
    %c0_93 = arith.constant 0 : index
    %296 = vector.load %arg3[%c18, %c0_93] : memref<20x128xf32, #tpu.memory_space<vmem>>, vector<1x32xf32>
    %297 = vector.broadcast %296 : vector<1x32xf32> to vector<2x32xf32>
    %298 = arith.addf %295, %297 : vector<2x32xf32>
    %299 = math.tanh %298 : vector<2x32xf32>
    %300 = arith.truncf %299 : vector<2x32xf32> to vector<2x32xbf16>
    %c352 = arith.constant 352 : index
    %c0_94 = arith.constant 0 : index
    %301 = vector.load %arg2[%c352, %c0_94] : memref<384x128xbf16, #tpu.memory_space<vmem>>, vector<32x128xbf16>
    %cst_95 = arith.constant dense<0.000000e+00> : vector<2x128xf32>
    %302 = tpu.matmul %300, %301, %cst_95 {dimension_numbers = #tpu.dot_dimension_numbers<[1], [0], [0], [1], [0, 0, 1, 1], [], []>} : vector<2x32xbf16>, vector<32x128xbf16>, vector<2x128xf32> -> vector<2x128xf32>
    %c19 = arith.constant 19 : index
    %c0_96 = arith.constant 0 : index
    %303 = vector.load %arg3[%c19, %c0_96] : memref<20x128xf32, #tpu.memory_space<vmem>>, vector<1x128xf32>
    %304 = vector.broadcast %303 : vector<1x128xf32> to vector<2x128xf32>
    %305 = arith.addf %302, %304 : vector<2x128xf32>
    %c0_97 = arith.constant 0 : index
    %c0_98 = arith.constant 0 : index
    %306 = vector.load %arg4[%c0_97, %c0_98] : memref<2x128xf32, #tpu.memory_space<vmem>>, vector<2x128xf32>
    tpu.vector_store %arg4[%c0_97, %c0_98], %305 {strides = array<i32>} : memref<2x128xf32, #tpu.memory_space<vmem>>, vector<2x128xf32>,
    return
  }
}

</mosaic_0001>

<llo_original>
// kernel: entity_typing_forward.1
$region0: #{entity_typing_forward.1}
  #allocation0 [shape = 'u32[]', space=smem, size = 0x4, offset = 0x4, fixed_abs, tag = 'smem constant byte address 0x4 - core index']
  #allocation1 [shape = 'u32[144,128]{1,0:T(1,128)}', space=vmem, size = 0x12000, scoped, tag = 'internal scratch']
  %s0 = inlined_call_operand.vmem [shape: f32[16,32], index: 0, kind: input, shape index: {}]
  %s1 = inlined_call_operand.vmem [shape: f32[16,16], index: 1, kind: input, shape index: {}]
  %s2 = inlined_call_operand.vmem [shape: bf16[384,128], index: 2, kind: input, shape index: {}]
  %s3 = inlined_call_operand.vmem [shape: f32[20,128], index: 3, kind: input, shape index: {}]
  %s4 = inlined_call_operand.hbm [shape: f32[2,128], index: 4, kind: output, shape index: {}]
  %s5 = sld [smem:[#allocation0]]
  $region26: #{entity_typing_forward.1} parent=0
    _
  %s7 = ssub.s32 1, %s5
  %s8 = scalar_select 0, %s7, %s5
  $region1: #{entity_typing_forward.1} parent=0
    #allocation2 [shape = 'u8[1024]{0}', space=vmem, size = 0x400, scoped, tag = 'output window, operand 0, single buffered']
    #allocation3 [shape = 's32[1]{0}', space=sflag, size = 0x4, scoped, tag = 'scoped memory for entity_typing_forward.1']
    %9 = vsyncpa [#allocation3], 0
    // Predicated region
    $region2: #{entity_typing_forward.1} parent=1 // pred_check
      _
    $region3: #{entity_typing_forward.1} parent=1 // pred_check_branch
      %11 = sbr.rel (0) target = $region5
    $region4: #{entity_typing_forward.1} parent=1 // pred_region
      _
    $region5: #{entity_typing_forward.1} parent=1 // pred_fallthru
      _
    // Predicated region
    $region6: #{entity_typing_forward.1} parent=1 // pred_check
      _
    $region7: #{entity_typing_forward.1} parent=1 // pred_check_branch
      %13 = sbr.rel (0) target = $region9
    $region8: #{entity_typing_forward.1} parent=1 // pred_region
      _
    $region9: #{entity_typing_forward.1} parent=1 // pred_fallthru
      _
    // Predicated region
    $region10: #{entity_typing_forward.1} parent=1 // pred_check
      _
    $region11: #{entity_typing_forward.1} parent=1 // pred_check_branch
      %15 = sbr.rel (0) target = $region13
    $region12: #{entity_typing_forward.1} parent=1 // pred_region
      _
    $region13: #{entity_typing_forward.1} parent=1 // pred_fallthru
      _
    // Predicated region
    $region14: #{entity_typing_forward.1} parent=1 // pred_check
      _
    $region15: #{entity_typing_forward.1} parent=1 // pred_check_branch
      %17 = sbr.rel (0) target = $region17
    $region16: #{entity_typing_forward.1} parent=1 // pred_region
      _
    $region17: #{entity_typing_forward.1} parent=1 // pred_fallthru
      _
    %v19 = vld [vmem:[%s0] sm:$0xff]
    %v20 = vld [vmem:[%s0 + $0x8] sm:$0xff]
    %v21 = vld [vmem:[%s1] sm:$0xff]
    %v22 = vld [vmem:[%s1 + $0x8] sm:$0xff]
    %v23 = vld [vmem:[%s3] sm:$0x1]
    %v24 = vld [vmem:[%s3 + $0x1] sm:$0x1]
    %vm25 = vcmask 261120
    %v26 = vsel %vm25, %v19, 0.0
    %27 = vadd.xlane.f32.xlu0 %v26
    %v28 = vpop.xlane.xlu0 %27
    %v29 = vsel %vm25, %v20, 0.0
    %30 = vadd.xlane.f32.xlu0 %v29
    %v31 = vpop.xlane.xlu0 %30
    %v32 = vrcp.pop 32.0
    %v33 = vmul.f32 %v28, %v32
    %v34 = vmul.f32 %v31, %v32
    %v35 = vsub.f32 %v19, %v33
    %v36 = vsub.f32 %v20, %v34
    %v37 = vmul.f32 %v35, %v35
    %v38 = vmul.f32 %v36, %v36
    %v39 = vsel %vm25, %v37, 0.0
    %40 = vadd.xlane.f32.xlu0 %v39
    %v41 = vpop.xlane.xlu0 %40
    %v42 = vsel %vm25, %v38, 0.0
    %43 = vadd.xlane.f32.xlu0 %v42
    %v44 = vpop.xlane.xlu0 %43
    %v45 = vmul.f32 %v41, %v32
    %v46 = vmul.f32 %v44, %v32
    %v47 = vadd.f32 %v45, 1e-12
    %v48 = vadd.f32 %v46, 1e-12
    %v49 = vrsqrt.pop %v47
    %v50 = vrsqrt.pop %v48
    %v51 = vmul.f32 %v35, %v49
    %v52 = vmul.f32 %v36, %v50
    %v53 = vlaneseq
    %v54 = vshrl.u32 %v53, 7
    %v55 = vsub.s32 0, %v54
    %v56 = vrot.slane %v23, %v55
    %v57 = vmul.f32 %v51, %v56
    %v58 = vmul.f32 %v52, %v56
    %v59 = vlaneseq
    %v60 = vshrl.u32 %v59, 7
    %v61 = vsub.s32 0, %v60
    %v62 = vrot.slane %v24, %v61
    %v63 = vadd.f32 %v57, %v62
    %v64 = vadd.f32 %v58, %v62
    %v65 = vpack.c.bf16 %v64, %v63
    %v66 = vld [vmem:[%s2] sm:$0xf]
    %v67 = vld [vmem:[%s2 + $0x4] sm:$0xf]
    %v68 = vld [vmem:[%s2 + $0x8] sm:$0xf]
    %v69 = vld [vmem:[%s2 + $0xc] sm:$0xf]
    %v70 = vld [vmem:[%s3 + $0x2] sm:$0x1]
    %v71 = vlaneseq
    %v72 = vshrl.u32 %v71, 7
    %v73 = vsub.s32 0, %v72
    %v74 = vrot.slane %v70, %v73
    %v79 = vunpack.c.l.b16 %v66
    %v80 = vunpack.c.l.b16 %v67
    %v81 = vunpack.c.l.b16 %v68
    %v82 = vunpack.c.l.b16 %v69
    %v83 = vpack.c.b16 %v80, %v79
    %v84 = vpack.c.b16 %v82, %v81
    %v88 = vsel %vm25, %v65, 0
    %90 = vmatprep.subr.bf16.mxu0 0
    %91 = vmatpush1.bf16.msra.mxu0 %v83
    %92 = vmatprep.subr.bf16.mxu0 0
    %93 = vmatpush1.bf16.msra.mxu0 %v84
    %94 = vmatprep.subr.bf16.mxu0 0
    %95 = vmatpush1.bf16.msra.mxu0 0
    %96 = vmatprep.subr.bf16.mxu0 0
    %97 = vmatpush1.bf16.msra.mxu0 0
    %98 = vmatprep.subr.bf16.mxu0 0
    %99 = vmatpush1.bf16.msra.mxu0 0
    %100 = vmatprep.subr.bf16.mxu0 0
    %101 = vmatpush1.bf16.msra.mxu0 0
    %102 = vmatprep.subr.bf16.mxu0 0
    %103 = vmatpush1.bf16.msra.mxu0 0
    %104 = vmatprep.subr.bf16.mxu0 0
    %105 = vmatpush1.bf16.msra.mxu0 0
    %106 = vmatprep.subr.bf16.mxu0 0
    %107 = vmatpush1.bf16.msra.mxu0 0
    %108 = vmatprep.subr.bf16.mxu0 0
    %109 = vmatpush1.bf16.msra.mxu0 0
    %110 = vmatprep.subr.bf16.mxu0 0
    %111 = vmatpush1.bf16.msra.mxu0 0
    %112 = vmatprep.subr.bf16.mxu0 0
    %113 = vmatpush1.bf16.msra.mxu0 0
    %114 = vmatprep.subr.bf16.mxu0 0
    %115 = vmatpush1.bf16.msra.mxu0 0
    %116 = vmatprep.subr.bf16.mxu0 0
    %117 = vmatpush1.bf16.msra.mxu0 0
    %118 = vmatprep.subr.bf16.mxu0 0
    %119 = vmatpush1.bf16.msra.mxu0 0
    %120 = vmatprep.subr.bf16.mxu0 0
    %121 = vmatpush1.bf16.msra.mxu0 0
    %122 = vmatprep.mubr.bf16.mxu0 0
    %123 = vmatmul.mubr.bf16.gmra.mrb[0].mxu0 %v88
    %v124 = vpop.f32.mrb[0].mxu0
    %v125 = vadd.f32 %v74, %v124
    %v126 = vpop.f32.mrb[0].mxu0
    %v127 = vpop.f32.mrb[0].mxu0
    %v128 = vadd.f32 %v74, %v127
    %v129 = vpop.f32.mrb[0].mxu0
    %130 = vdwg.mxu0
    %v131 = vpack.c.bf16 %v128, %v125
    %133 = vrot.lane.b32.xlu0 %v131, 96
    %v134 = vpop.permute.xlu0 %133
    %vm135 = vcmask 130048
    %v137 = vsel %vm135, %v131, 0
    %v140 = vsel %vm135, %v134, 0
    %142 = vmatprep.subr.bf16.mxu0 0
    %143 = vmatpush1.bf16.xpose.msra.mxu0 %v140
    %144 = vmatprep.subr.bf16.mxu0 0
    %145 = vmatpush1.bf16.xpose.msra.mxu0 0
    %146 = vmatprep.subr.bf16.mxu0 0
    %147 = vmatpush1.bf16.xpose.msra.mxu0 0
    %148 = vmatprep.subr.bf16.mxu0 0
    %149 = vmatpush1.bf16.xpose.msra.mxu0 0
    %150 = vmatprep.subr.bf16.mxu0 0
    %151 = vmatpush1.bf16.xpose.msra.mxu0 0
    %152 = vmatprep.subr.bf16.mxu0 0
    %153 = vmatpush1.bf16.xpose.msra.mxu0 0
    %154 = vmatprep.subr.bf16.mxu0 0
    %155 = vmatpush1.bf16.xpose.msra.mxu0 0
    %156 = vmatprep.subr.bf16.mxu0 0
    %157 = vmatpush1.bf16.xpose.msra.mxu0 0
    %158 = vmatprep.subr.bf16.mxu0 0
    %159 = vmatpush1.bf16.xpose.msra.mxu0 0
    %160 = vmatprep.subr.bf16.mxu0 0
    %161 = vmatpush1.bf16.xpose.msra.mxu0 0
    %162 = vmatprep.subr.bf16.mxu0 0
    %163 = vmatpush1.bf16.xpose.msra.mxu0 0
    %164 = vmatprep.subr.bf16.mxu0 0
    %165 = vmatpush1.bf16.xpose.msra.mxu0 0
    %166 = vmatprep.subr.bf16.mxu0 0
    %167 = vmatpush1.bf16.xpose.msra.mxu0 0
    %168 = vmatprep.subr.bf16.mxu0 0
    %169 = vmatpush1.bf16.xpose.msra.mxu0 0
    %170 = vmatprep.subr.bf16.mxu0 0
    %171 = vmatpush1.bf16.xpose.msra.mxu0 0
    %172 = vmatprep.subr.bf16.mxu0 0
    %173 = vmatpush1.bf16.xpose.msra.mxu0 0
    %174 = vmatprep.mubr.bf16.mxu0 0
    %175 = vmatmul.mubr.bf16.gmra.mrb[0].mxu0 %v137
    %v176 = vpop.f32.mrb[0].mxu0
    %v177 = vadd.f32 0.0, %v176
    %v178 = vpop.f32.mrb[0].mxu0
    %v179 = vpop.f32.mrb[0].mxu0
    %v180 = vadd.f32 0.0, %v179
    %v181 = vpop.f32.mrb[0].mxu0
    %182 = vdwg.mxu0
    %v183 = vmul.f32 %v177, 0.25
    %v184 = vmul.f32 %v180, 0.25
    %v185 = vadd.f32 %v183, %v21
    %v186 = vadd.f32 %v184, %v22
    %v187 = vsel %vm135, %v185, -inf
    %188 = vmax.xlane.f32.xlu0 %v187
    %v189 = vpop.xlane.xlu0 %188
    %v190 = vsel %vm135, %v186, -inf
    %191 = vmax.xlane.f32.xlu0 %v190
    %v192 = vpop.xlane.xlu0 %191
    %v193 = vsub.f32 %v185, %v189
    %v194 = vsub.f32 %v186, %v192
    %v195 = vmul.f32 %v193, 1.442695
    %v196 = vpow.pop %v195
    %v197 = vmul.f32 %v194, 1.442695
    %v198 = vpow.pop %v197
    %v199 = vsel %vm135, %v196, 0.0
    %200 = vadd.xlane.f32.xlu0 %v199
    %v201 = vpop.xlane.xlu0 %200
    %v202 = vsel %vm135, %v198, 0.0
    %203 = vadd.xlane.f32.xlu0 %v202
    %v204 = vpop.xlane.xlu0 %203
    %v205 = vrcp.pop %v201
    %v206 = vrcp.pop %v204
    %v207 = vmul.f32 %v196, %v205
    %v208 = vmul.f32 %v198, %v206
    %v209 = vpack.c.bf16 %v208, %v207
    %210 = vrot.lane.b32.xlu0 %v131, 64
    %v211 = vpop.permute.xlu0 %210
    %v214 = vsel %vm135, %v209, 0
    %216 = vmatprep.subr.bf16.mxu0 0
    %217 = vmatpush1.bf16.msra.mxu0 %v211
    %218 = vmatprep.subr.bf16.mxu0 0
    %219 = vmatpush1.bf16.msra.mxu0 0
    %220 = vmatprep.subr.bf16.mxu0 0
    %221 = vmatpush1.bf16.msra.mxu0 0
    %222 = vmatprep.subr.bf16.mxu0 0
    %223 = vmatpush1.bf16.msra.mxu0 0
    %224 = vmatprep.subr.bf16.mxu0 0
    %225 = vmatpush1.bf16.msra.mxu0 0
    %226 = vmatprep.subr.bf16.mxu0 0
    %227 = vmatpush1.bf16.msra.mxu0 0
    %228 = vmatprep.subr.bf16.mxu0 0
    %229 = vmatpush1.bf16.msra.mxu0 0
    %230 = vmatprep.subr.bf16.mxu0 0
    %231 = vmatpush1.bf16.msra.mxu0 0
    %232 = vmatprep.subr.bf16.mxu0 0
    %233 = vmatpush1.bf16.msra.mxu0 0
    %234 = vmatprep.subr.bf16.mxu0 0
    %235 = vmatpush1.bf16.msra.mxu0 0
    %236 = vmatprep.subr.bf16.mxu0 0
    %237 = vmatpush1.bf16.msra.mxu0 0
    %238 = vmatprep.subr.bf16.mxu0 0
    %239 = vmatpush1.bf16.msra.mxu0 0
    %240 = vmatprep.subr.bf16.mxu0 0
    %241 = vmatpush1.bf16.msra.mxu0 0
    %242 = vmatprep.subr.bf16.mxu0 0
    %243 = vmatpush1.bf16.msra.mxu0 0
    %244 = vmatprep.subr.bf16.mxu0 0
    %245 = vmatpush1.bf16.msra.mxu0 0
    %246 = vmatprep.subr.bf16.mxu0 0
    %247 = vmatpush1.bf16.msra.mxu0 0
    %248 = vmatprep.mubr.bf16.mxu0 0
    %249 = vmatmul.mubr.bf16.gmra.mrb[0].mxu0 %v214
    %v250 = vpop.f32.mrb[0].mxu0
    %v251 = vadd.f32 0.0, %v250
    %v252 = vpop.f32.mrb[0].mxu0
    %v253 = vpop.f32.mrb[0].mxu0
    %v254 = vadd.f32 0.0, %v253
    %v255 = vpop.f32.mrb[0].mxu0
    %256 = vdwg.mxu0
    %257 = vrot.lane.b32.xlu0 %v131, 112
    %v258 = vpop.permute.xlu0 %257
    %259 = vrot.lane.b32.xlu0 %v131, 80
    %v260 = vpop.permute.xlu0 %259
    %v262 = vsel %vm135, %v258, 0
    %v265 = vsel %vm135, %v260, 0
    %267 = vmatprep.subr.bf16.mxu0 0
    %268 = vmatpush1.bf16.xpose.msra.mxu0 %v265
    %269 = vmatprep.subr.bf16.mxu0 0
    %270 = vmatpush1.bf16.xpose.msra.mxu0 0
    %271 = vmatprep.subr.bf16.mxu0 0
    %272 = vmatpush1.bf16.xpose.msra.mxu0 0
    %273 = vmatprep.subr.bf16.mxu0 0
    %274 = vmatpush1.bf16.xpose.msra.mxu0 0
    %275 = vmatprep.subr.bf16.mxu0 0
    %276 = vmatpush1.bf16.xpose.msra.mxu0 0
    %277 = vmatprep.subr.bf16.mxu0 0
    %278 = vmatpush1.bf16.xpose.msra.mxu0 0
    %279 = vmatprep.subr.bf16.mxu0 0
    %280 = vmatpush1.bf16.xpose.msra.mxu0 0
    %281 = vmatprep.subr.bf16.mxu0 0
    %282 = vmatpush1.bf16.xpose.msra.mxu0 0
    %283 = vmatprep.subr.bf16.mxu0 0
    %284 = vmatpush1.bf16.xpose.msra.mxu0 0
    %285 = vmatprep.subr.bf16.mxu0 0
    %286 = vmatpush1.bf16.xpose.msra.mxu0 0
    %287 = vmatprep.subr.bf16.mxu0 0
    %288 = vmatpush1.bf16.xpose.msra.mxu0 0
    %289 = vmatprep.subr.bf16.mxu0 0
    %290 = vmatpush1.bf16.xpose.msra.mxu0 0
    %291 = vmatprep.subr.bf16.mxu0 0
    %292 = vmatpush1.bf16.xpose.msra.mxu0 0
    %293 = vmatprep.subr.bf16.mxu0 0
    %294 = vmatpush1.bf16.xpose.msra.mxu0 0
    %295 = vmatprep.subr.bf16.mxu0 0
    %296 = vmatpush1.bf16.xpose.msra.mxu0 0
    %297 = vmatprep.subr.bf16.mxu0 0
    %298 = vmatpush1.bf16.xpose.msra.mxu0 0
    %299 = vmatprep.mubr.bf16.mxu0 0
    %300 = vmatmul.mubr.bf16.gmra.mrb[0].mxu0 %v262
    %v301 = vpop.f32.mrb[0].mxu0
    %v302 = vadd.f32 0.0, %v301
    %v303 = vpop.f32.mrb[0].mxu0
    %v304 = vpop.f32.mrb[0].mxu0
    %v305 = vadd.f32 0.0, %v304
    %v306 = vpop.f32.mrb[0].mxu0
    %307 = vdwg.mxu0
    %v308 = vmul.f32 %v302, 0.25
    %v309 = vmul.f32 %v305, 0.25
    %v310 = vadd.f32 %v308, %v21
    %v311 = vadd.f32 %v309, %v22
    %v312 = vsel %vm135, %v310, -inf
    %313 = vmax.xlane.f32.xlu0 %v312
    %v314 = vpop.xlane.xlu0 %313
    %v315 = vsel %vm135, %v311, -inf
    %316 = vmax.xlane.f32.xlu0 %v315
    %v317 = vpop.xlane.xlu0 %316
    %v318 = vsub.f32 %v310, %v314
    %v319 = vsub.f32 %v311, %v317
    %v320 = vmul.f32 %v318, 1.442695
    %v321 = vpow.pop %v320
    %v322 = vmul.f32 %v319, 1.442695
    %v323 = vpow.pop %v322
    %v324 = vsel %vm135, %v321, 0.0
    %325 = vadd.xlane.f32.xlu0 %v324
    %v326 = vpop.xlane.xlu0 %325
    %v327 = vsel %vm135, %v323, 0.0
    %328 = vadd.xlane.f32.xlu0 %v327
    %v329 = vpop.xlane.xlu0 %328
    %v330 = vrcp.pop %v326
    %v331 = vrcp.pop %v329
    %v332 = vmul.f32 %v321, %v330
    %v333 = vmul.f32 %v323, %v331
    %v334 = vpack.c.bf16 %v333, %v332
    %335 = vrot.lane.b32.xlu0 %v131, 48
    %v336 = vpop.permute.xlu0 %335
    %v339 = vsel %vm135, %v334, 0
    %341 = vmatprep.subr.bf16.mxu0 0
    %342 = vmatpush1.bf16.msra.mxu0 %v336
    %343 = vmatprep.subr.bf16.mxu0 0
    %344 = vmatpush1.bf16.msra.mxu0 0
    %345 = vmatprep.subr.bf16.mxu0 0
    %346 = vmatpush1.bf16.msra.mxu0 0
    %347 = vmatprep.subr.bf16.mxu0 0
    %348 = vmatpush1.bf16.msra.mxu0 0
    %349 = vmatprep.subr.bf16.mxu0 0
    %350 = vmatpush1.bf16.msra.mxu0 0
    %351 = vmatprep.subr.bf16.mxu0 0
    %352 = vmatpush1.bf16.msra.mxu0 0
    %353 = vmatprep.subr.bf16.mxu0 0
    %354 = vmatpush1.bf16.msra.mxu0 0
    %355 = vmatprep.subr.bf16.mxu0 0
    %356 = vmatpush1.bf16.msra.mxu0 0
    %357 = vmatprep.subr.bf16.mxu0 0
    %358 = vmatpush1.bf16.msra.mxu0 0
    %359 = vmatprep.subr.bf16.mxu0 0
    %360 = vmatpush1.bf16.msra.mxu0 0
    %361 = vmatprep.subr.bf16.mxu0 0
    %362 = vmatpush1.bf16.msra.mxu0 0
    %363 = vmatprep.subr.bf16.mxu0 0
    %364 = vmatpush1.bf16.msra.mxu0 0
    %365 = vmatprep.subr.bf16.mxu0 0
    %366 = vmatpush1.bf16.msra.mxu0 0
    %367 = vmatprep.subr.bf16.mxu0 0
    %368 = vmatpush1.bf16.msra.mxu0 0
    %369 = vmatprep.subr.bf16.mxu0 0
    %370 = vmatpush1.bf16.msra.mxu0 0
    %371 = vmatprep.subr.bf16.mxu0 0
    %372 = vmatpush1.bf16.msra.mxu0 0
    %373 = vmatprep.mubr.bf16.mxu0 0
    %374 = vmatmul.mubr.bf16.gmra.mrb[0].mxu0 %v339
    %v375 = vpop.f32.mrb[0].mxu0
    %v376 = vadd.f32 0.0, %v375
    %v377 = vpop.f32.mrb[0].mxu0
    %v378 = vpop.f32.mrb[0].mxu0
    %v379 = vadd.f32 0.0, %v378
    %v380 = vpop.f32.mrb[0].mxu0
    %381 = vdwg.mxu0
    %384 = vrot.lane.b32.xlu0 %v376, 16
    %v385 = vpop.permute.xlu0 %384
    %386 = vrot.lane.b32.xlu0 %v379, 16
    %v387 = vpop.permute.xlu0 %386
    %v390 = vsel %vm135, %v251, %v385
    %v391 = vsel %vm135, %v254, %v387
    %v392 = vpack.c.bf16 %v391, %v390
    %v393 = vld [vmem:[%s2 + $0x10] sm:$0xf]
    %v394 = vld [vmem:[%s2 + $0x14] sm:$0xf]
    %v395 = vld [vmem:[%s2 + $0x18] sm:$0xf]
    %v396 = vld [vmem:[%s2 + $0x1c] sm:$0xf]
    %v397 = vld [vmem:[%s3 + $0x3] sm:$0x1]
    %v398 = vlaneseq
    %v399 = vshrl.u32 %v398, 7
    %v400 = vsub.s32 0, %v399
    %v401 = vrot.slane %v397, %v400
    %v406 = vunpack.c.l.b16 %v393
    %v407 = vunpack.c.l.b16 %v394
    %v408 = vunpack.c.l.b16 %v395
    %v409 = vunpack.c.l.b16 %v396
    %v410 = vpack.c.b16 %v407, %v406
    %v411 = vpack.c.b16 %v409, %v408
    %v415 = vsel %vm25, %v392, 0
    %417 = vmatprep.subr.bf16.mxu0 0
    %418 = vmatpush1.bf16.msra.mxu0 %v410
    %419 = vmatprep.subr.bf16.mxu0 0
    %420 = vmatpush1.bf16.msra.mxu0 %v411
    %421 = vmatprep.subr.bf16.mxu0 0
    %422 = vmatpush1.bf16.msra.mxu0 0
    %423 = vmatprep.subr.bf16.mxu0 0
    %424 = vmatpush1.bf16.msra.mxu0 0
    %425 = vmatprep.subr.bf16.mxu0 0
    %426 = vmatpush1.bf16.msra.mxu0 0
    %427 = vmatprep.subr.bf16.mxu0 0
    %428 = vmatpush1.bf16.msra.mxu0 0
    %429 = vmatprep.subr.bf16.mxu0 0
    %430 = vmatpush1.bf16.msra.mxu0 0
    %431 = vmatprep.subr.bf16.mxu0 0
    %432 = vmatpush1.bf16.msra.mxu0 0
    %433 = vmatprep.subr.bf16.mxu0 0
    %434 = vmatpush1.bf16.msra.mxu0 0
    %435 = vmatprep.subr.bf16.mxu0 0
    %436 = vmatpush1.bf16.msra.mxu0 0
    %437 = vmatprep.subr.bf16.mxu0 0
    %438 = vmatpush1.bf16.msra.mxu0 0
    %439 = vmatprep.subr.bf16.mxu0 0
    %440 = vmatpush1.bf16.msra.mxu0 0
    %441 = vmatprep.subr.bf16.mxu0 0
    %442 = vmatpush1.bf16.msra.mxu0 0
    %443 = vmatprep.subr.bf16.mxu0 0
    %444 = vmatpush1.bf16.msra.mxu0 0
    %445 = vmatprep.subr.bf16.mxu0 0
    %446 = vmatpush1.bf16.msra.mxu0 0
    %447 = vmatprep.subr.bf16.mxu0 0
    %448 = vmatpush1.bf16.msra.mxu0 0
    %449 = vmatprep.mubr.bf16.mxu0 0
    %450 = vmatmul.mubr.bf16.gmra.mrb[0].mxu0 %v415
    %v451 = vpop.f32.mrb[0].mxu0
    %v452 = vadd.f32 %v401, %v451
    %v453 = vpop.f32.mrb[0].mxu0
    %v454 = vpop.f32.mrb[0].mxu0
    %v455 = vadd.f32 %v401, %v454
    %v456 = vpop.f32.mrb[0].mxu0
    %457 = vdwg.mxu0
    %v458 = vadd.f32 %v452, %v63
    %v459 = vadd.f32 %v455, %v64
    %v460 = vld [vmem:[%s3 + $0x4] sm:$0x1]
    %v461 = vld [vmem:[%s3 + $0x5] sm:$0x1]
    %v462 = vsel %vm25, %v458, 0.0
    %463 = vadd.xlane.f32.xlu0 %v462
    %v464 = vpop.xlane.xlu0 %463
    %v465 = vsel %vm25, %v459, 0.0
    %466 = vadd.xlane.f32.xlu0 %v465
    %v467 = vpop.xlane.xlu0 %466
    %v468 = vmul.f32 %v464, %v32
    %v469 = vmul.f32 %v467, %v32
    %v470 = vsub.f32 %v458, %v468
    %v471 = vsub.f32 %v459, %v469
    %v472 = vmul.f32 %v470, %v470
    %v473 = vmul.f32 %v471, %v471
    %v474 = vsel %vm25, %v472, 0.0
    %475 = vadd.xlane.f32.xlu0 %v474
    %v476 = vpop.xlane.xlu0 %475
    %v477 = vsel %vm25, %v473, 0.0
    %478 = vadd.xlane.f32.xlu0 %v477
    %v479 = vpop.xlane.xlu0 %478
    %v480 = vmul.f32 %v476, %v32
    %v481 = vmul.f32 %v479, %v32
    %v482 = vadd.f32 %v480, 1e-12
    %v483 = vadd.f32 %v481, 1e-12
    %v484 = vrsqrt.pop %v482
    %v485 = vrsqrt.pop %v483
    %v486 = vmul.f32 %v470, %v484
    %v487 = vmul.f32 %v471, %v485
    %v488 = vlaneseq
    %v489 = vshrl.u32 %v488, 7
    %v490 = vsub.s32 0, %v489
    %v491 = vrot.slane %v460, %v490
    %v492 = vmul.f32 %v486, %v491
    %v493 = vmul.f32 %v487, %v491
    %v494 = vlaneseq
    %v495 = vshrl.u32 %v494, 7
    %v496 = vsub.s32 0, %v495
    %v497 = vrot.slane %v461, %v496
    %v498 = vadd.f32 %v492, %v497
    %v499 = vadd.f32 %v493, %v497
    %v500 = vpack.c.bf16 %v499, %v498
    %v501 = vld [vmem:[%s2 + $0x20] sm:$0xf]
    %v502 = vld [vmem:[%s2 + $0x24] sm:$0xf]
    %v503 = vld [vmem:[%s2 + $0x28] sm:$0xf]
    %v504 = vld [vmem:[%s2 + $0x2c] sm:$0xf]
    %v505 = vld [vmem:[%s3 + $0x6] sm:$0x1]
    %v506 = vlaneseq
    %v507 = vshrl.u32 %v506, 7
    %v508 = vsub.s32 0, %v507
    %v509 = vrot.slane %v505, %v508
    %v514 = vunpack.c.l.b16 %v501
    %v515 = vunpack.c.l.b16 %v502
    %v516 = vunpack.c.l.b16 %v503
    %v517 = vunpack.c.l.b16 %v504
    %v518 = vpack.c.b16 %v515, %v514
    %v519 = vpack.c.b16 %v517, %v516
    %v523 = vsel %vm25, %v500, 0
    %525 = vmatprep.subr.bf16.mxu0 0
    %526 = vmatpush1.bf16.msra.mxu0 %v518
    %527 = vmatprep.subr.bf16.mxu0 0
    %528 = vmatpush1.bf16.msra.mxu0 %v519
    %529 = vmatprep.subr.bf16.mxu0 0
    %530 = vmatpush1.bf16.msra.mxu0 0
    %531 = vmatprep.subr.bf16.mxu0 0
    %532 = vmatpush1.bf16.msra.mxu0 0
    %533 = vmatprep.subr.bf16.mxu0 0
    %534 = vmatpush1.bf16.msra.mxu0 0
    %535 = vmatprep.subr.bf16.mxu0 0
    %536 = vmatpush1.bf16.msra.mxu0 0
    %537 = vmatprep.subr.bf16.mxu0 0
    %538 = vmatpush1.bf16.msra.mxu0 0
    %539 = vmatprep.subr.bf16.mxu0 0
    %540 = vmatpush1.bf16.msra.mxu0 0
    %541 = vmatprep.subr.bf16.mxu0 0
    %542 = vmatpush1.bf16.msra.mxu0 0
    %543 = vmatprep.subr.bf16.mxu0 0
    %544 = vmatpush1.bf16.msra.mxu0 0
    %545 = vmatprep.subr.bf16.mxu0 0
    %546 = vmatpush1.bf16.msra.mxu0 0
    %547 = vmatprep.subr.bf16.mxu0 0
    %548 = vmatpush1.bf16.msra.mxu0 0
    %549 = vmatprep.subr.bf16.mxu0 0
    %550 = vmatpush1.bf16.msra.mxu0 0
    %551 = vmatprep.subr.bf16.mxu0 0
    %552 = vmatpush1.bf16.msra.mxu0 0
    %553 = vmatprep.subr.bf16.mxu0 0
    %554 = vmatpush1.bf16.msra.mxu0 0
    %555 = vmatprep.subr.bf16.mxu0 0
    %556 = vmatpush1.bf16.msra.mxu0 0
    %557 = vmatprep.mubr.bf16.mxu0 0
    %558 = vmatmul.mubr.bf16.gmra.mrb[0].mxu0 %v523
    %v559 = vpop.f32.mrb[0].mxu0
    %v560 = vadd.f32 %v509, %v559
    %v561 = vpop.f32.mrb[0].mxu0
    %v562 = vpop.f32.mrb[0].mxu0
    %v563 = vadd.f32 %v509, %v562
    %v564 = vpop.f32.mrb[0].mxu0
    %565 = vdwg.mxu0
    %v566 = vmul.f32 %v560, 0.5
    %v567 = vmul.f32 %v563, 0.5
    %v568 = vmul.f32 %v560, 0.044715
    %v569 = vmul.f32 %v563, 0.044715
    %v570 = vmul.f32 %v568, %v560
    %v571 = vmul.f32 %v569, %v563
    %v572 = vmul.f32 %v570, %v560
    %v573 = vmul.f32 %v571, %v563
    %v574 = vadd.f32 %v560, %v572
    %v575 = vadd.f32 %v563, %v573
    %v576 = vmul.f32 %v574, 0.7978846
    %v577 = vmul.f32 %v575, 0.7978846
    %v578 = vtanh.pop %v576
    %v579 = vtanh.pop %v577
    %v580 = vadd.f32 %v578, 1.0
    %v581 = vadd.f32 %v579, 1.0
    %v582 = vmul.f32 %v566, %v580
    %v583 = vmul.f32 %v567, %v581
    %v584 = vpack.c.bf16 %v583, %v582
    %v585 = vld [vmem:[%s2 + $0x30] sm:$0xf]
    %v586 = vld [vmem:[%s2 + $0x34] sm:$0xf]
    %v587 = vld [vmem:[%s2 + $0x38] sm:$0xf]
    %v588 = vld [vmem:[%s2 + $0x3c] sm:$0xf]
    %v589 = vld [vmem:[%s2 + $0x40] sm:$0xf]
    %v590 = vld [vmem:[%s2 + $0x44] sm:$0xf]
    %v591 = vld [vmem:[%s2 + $0x48] sm:$0xf]
    %v592 = vld [vmem:[%s2 + $0x4c] sm:$0xf]
    %v593 = vld [vmem:[%s3 + $0x7] sm:$0x1]
    %v594 = vlaneseq
    %v595 = vshrl.u32 %v594, 7
    %v596 = vsub.s32 0, %v595
    %v597 = vrot.slane %v593, %v596
    %v606 = vunpack.c.l.b16 %v585
    %v607 = vunpack.c.l.b16 %v586
    %v608 = vunpack.c.l.b16 %v587
    %v609 = vunpack.c.l.b16 %v588
    %v610 = vunpack.c.l.b16 %v589
    %v611 = vunpack.c.l.b16 %v590
    %v612 = vunpack.c.l.b16 %v591
    %v613 = vunpack.c.l.b16 %v592
    %v614 = vpack.c.b16 %v607, %v606
    %v615 = vpack.c.b16 %v609, %v608
    %v616 = vpack.c.b16 %v611, %v610
    %v617 = vpack.c.b16 %v613, %v612
    %vm622 = vcmask 523264
    %v624 = vsel %vm622, %v584, 0
    %626 = vmatprep.subr.bf16.mxu0 0
    %627 = vmatpush1.bf16.msra.mxu0 %v614
    %628 = vmatprep.subr.bf16.mxu0 0
    %629 = vmatpush1.bf16.msra.mxu0 %v615
    %630 = vmatprep.subr.bf16.mxu0 0
    %631 = vmatpush1.bf16.msra.mxu0 %v616
    %632 = vmatprep.subr.bf16.mxu0 0
    %633 = vmatpush1.bf16.msra.mxu0 %v617
    %634 = vmatprep.subr.bf16.mxu0 0
    %635 = vmatpush1.bf16.msra.mxu0 0
    %636 = vmatprep.subr.bf16.mxu0 0
    %637 = vmatpush1.bf16.msra.mxu0 0
    %638 = vmatprep.subr.bf16.mxu0 0
    %639 = vmatpush1.bf16.msra.mxu0 0
    %640 = vmatprep.subr.bf16.mxu0 0
    %641 = vmatpush1.bf16.msra.mxu0 0
    %642 = vmatprep.subr.bf16.mxu0 0
    %643 = vmatpush1.bf16.msra.mxu0 0
    %644 = vmatprep.subr.bf16.mxu0 0
    %645 = vmatpush1.bf16.msra.mxu0 0
    %646 = vmatprep.subr.bf16.mxu0 0
    %647 = vmatpush1.bf16.msra.mxu0 0
    %648 = vmatprep.subr.bf16.mxu0 0
    %649 = vmatpush1.bf16.msra.mxu0 0
    %650 = vmatprep.subr.bf16.mxu0 0
    %651 = vmatpush1.bf16.msra.mxu0 0
    %652 = vmatprep.subr.bf16.mxu0 0
    %653 = vmatpush1.bf16.msra.mxu0 0
    %654 = vmatprep.subr.bf16.mxu0 0
    %655 = vmatpush1.bf16.msra.mxu0 0
    %656 = vmatprep.subr.bf16.mxu0 0
    %657 = vmatpush1.bf16.msra.mxu0 0
    %658 = vmatprep.mubr.bf16.mxu0 0
    %659 = vmatmul.mubr.bf16.gmra.mrb[0].mxu0 %v624
    %v660 = vpop.f32.mrb[0].mxu0
    %v661 = vadd.f32 %v597, %v660
    %v662 = vpop.f32.mrb[0].mxu0
    %v663 = vpop.f32.mrb[0].mxu0
    %v664 = vadd.f32 %v597, %v663
    %v665 = vpop.f32.mrb[0].mxu0
    %666 = vdwg.mxu0
    %v667 = vadd.f32 %v661, %v498
    %v668 = vadd.f32 %v664, %v499
    %v669 = vld [vmem:[%s3 + $0x8] sm:$0x1]
    %v670 = vld [vmem:[%s3 + $0x9] sm:$0x1]
    %v671 = vsel %vm25, %v667, 0.0
    %672 = vadd.xlane.f32.xlu0 %v671
    %v673 = vpop.xlane.xlu0 %672
    %v674 = vsel %vm25, %v668, 0.0
    %675 = vadd.xlane.f32.xlu0 %v674
    %v676 = vpop.xlane.xlu0 %675
    %v677 = vmul.f32 %v673, %v32
    %v678 = vmul.f32 %v676, %v32
    %v679 = vsub.f32 %v667, %v677
    %v680 = vsub.f32 %v668, %v678
    %v681 = vmul.f32 %v679, %v679
    %v682 = vmul.f32 %v680, %v680
    %v683 = vsel %vm25, %v681, 0.0
    %684 = vadd.xlane.f32.xlu0 %v683
    %v685 = vpop.xlane.xlu0 %684
    %v686 = vsel %vm25, %v682, 0.0
    %687 = vadd.xlane.f32.xlu0 %v686
    %v688 = vpop.xlane.xlu0 %687
    %v689 = vmul.f32 %v685, %v32
    %v690 = vmul.f32 %v688, %v32
    %v691 = vadd.f32 %v689, 1e-12
    %v692 = vadd.f32 %v690, 1e-12
    %v693 = vrsqrt.pop %v691
    %v694 = vrsqrt.pop %v692
    %v695 = vmul.f32 %v679, %v693
    %v696 = vmul.f32 %v680, %v694
    %v697 = vlaneseq
    %v698 = vshrl.u32 %v697, 7
    %v699 = vsub.s32 0, %v698
    %v700 = vrot.slane %v669, %v699
    %v701 = vmul.f32 %v695, %v700
    %v702 = vmul.f32 %v696, %v700
    %v703 = vlaneseq
    %v704 = vshrl.u32 %v703, 7
    %v705 = vsub.s32 0, %v704
    %v706 = vrot.slane %v670, %v705
    %v707 = vadd.f32 %v701, %v706
    %v708 = vadd.f32 %v702, %v706
    %v709 = vpack.c.bf16 %v708, %v707
    %v710 = vld [vmem:[%s2 + $0x50] sm:$0xf]
    %v711 = vld [vmem:[%s2 + $0x54] sm:$0xf]
    %v712 = vld [vmem:[%s2 + $0x58] sm:$0xf]
    %v713 = vld [vmem:[%s2 + $0x5c] sm:$0xf]
    %v714 = vld [vmem:[%s3 + $0xa] sm:$0x1]
    %v715 = vlaneseq
    %v716 = vshrl.u32 %v715, 7
    %v717 = vsub.s32 0, %v716
    %v718 = vrot.slane %v714, %v717
    %v723 = vunpack.c.l.b16 %v710
    %v724 = vunpack.c.l.b16 %v711
    %v725 = vunpack.c.l.b16 %v712
    %v726 = vunpack.c.l.b16 %v713
    %v727 = vpack.c.b16 %v724, %v723
    %v728 = vpack.c.b16 %v726, %v725
    %v732 = vsel %vm25, %v709, 0
    %734 = vmatprep.subr.bf16.mxu0 0
    %735 = vmatpush1.bf16.msra.mxu0 %v727
    %736 = vmatprep.subr.bf16.mxu0 0
    %737 = vmatpush1.bf16.msra.mxu0 %v728
    %738 = vmatprep.subr.bf16.mxu0 0
    %739 = vmatpush1.bf16.msra.mxu0 0
    %740 = vmatprep.subr.bf16.mxu0 0
    %741 = vmatpush1.bf16.msra.mxu0 0
    %742 = vmatprep.subr.bf16.mxu0 0
    %743 = vmatpush1.bf16.msra.mxu0 0
    %744 = vmatprep.subr.bf16.mxu0 0
    %745 = vmatpush1.bf16.msra.mxu0 0
    %746 = vmatprep.subr.bf16.mxu0 0
    %747 = vmatpush1.bf16.msra.mxu0 0
    %748 = vmatprep.subr.bf16.mxu0 0
    %749 = vmatpush1.bf16.msra.mxu0 0
    %750 = vmatprep.subr.bf16.mxu0 0
    %751 = vmatpush1.bf16.msra.mxu0 0
    %752 = vmatprep.subr.bf16.mxu0 0
    %753 = vmatpush1.bf16.msra.mxu0 0
    %754 = vmatprep.subr.bf16.mxu0 0
    %755 = vmatpush1.bf16.msra.mxu0 0
    %756 = vmatprep.subr.bf16.mxu0 0
    %757 = vmatpush1.bf16.msra.mxu0 0
    %758 = vmatprep.subr.bf16.mxu0 0
    %759 = vmatpush1.bf16.msra.mxu0 0
    %760 = vmatprep.subr.bf16.mxu0 0
    %761 = vmatpush1.bf16.msra.mxu0 0
    %762 = vmatprep.subr.bf16.mxu0 0
    %763 = vmatpush1.bf16.msra.mxu0 0
    %764 = vmatprep.subr.bf16.mxu0 0
    %765 = vmatpush1.bf16.msra.mxu0 0
    %766 = vmatprep.mubr.bf16.mxu0 0
    %767 = vmatmul.mubr.bf16.gmra.mrb[0].mxu0 %v732
    %v768 = vpop.f32.mrb[0].mxu0
    %v769 = vadd.f32 %v718, %v768
    %v770 = vpop.f32.mrb[0].mxu0
    %v771 = vpop.f32.mrb[0].mxu0
    %v772 = vadd.f32 %v718, %v771
    %v773 = vpop.f32.mrb[0].mxu0
    %774 = vdwg.mxu0
    %v775 = vpack.c.bf16 %v772, %v769
    %777 = vrot.lane.b32.xlu0 %v775, 96
    %v778 = vpop.permute.xlu0 %777
    %v780 = vsel %vm135, %v775, 0
    %v783 = vsel %vm135, %v778, 0
    %785 = vmatprep.subr.bf16.mxu0 0
    %786 = vmatpush1.bf16.xpose.msra.mxu0 %v783
    %787 = vmatprep.subr.bf16.mxu0 0
    %788 = vmatpush1.bf16.xpose.msra.mxu0 0
    %789 = vmatprep.subr.bf16.mxu0 0
    %790 = vmatpush1.bf16.xpose.msra.mxu0 0
    %791 = vmatprep.subr.bf16.mxu0 0
    %792 = vmatpush1.bf16.xpose.msra.mxu0 0
    %793 = vmatprep.subr.bf16.mxu0 0
    %794 = vmatpush1.bf16.xpose.msra.mxu0 0
    %795 = vmatprep.subr.bf16.mxu0 0
    %796 = vmatpush1.bf16.xpose.msra.mxu0 0
    %797 = vmatprep.subr.bf16.mxu0 0
    %798 = vmatpush1.bf16.xpose.msra.mxu0 0
    %799 = vmatprep.subr.bf16.mxu0 0
    %800 = vmatpush1.bf16.xpose.msra.mxu0 0
    %801 = vmatprep.subr.bf16.mxu0 0
    %802 = vmatpush1.bf16.xpose.msra.mxu0 0
    %803 = vmatprep.subr.bf16.mxu0 0
    %804 = vmatpush1.bf16.xpose.msra.mxu0 0
    %805 = vmatprep.subr.bf16.mxu0 0
    %806 = vmatpush1.bf16.xpose.msra.mxu0 0
    %807 = vmatprep.subr.bf16.mxu0 0
    %808 = vmatpush1.bf16.xpose.msra.mxu0 0
    %809 = vmatprep.subr.bf16.mxu0 0
    %810 = vmatpush1.bf16.xpose.msra.mxu0 0
    %811 = vmatprep.subr.bf16.mxu0 0
    %812 = vmatpush1.bf16.xpose.msra.mxu0 0
    %813 = vmatprep.subr.bf16.mxu0 0
    %814 = vmatpush1.bf16.xpose.msra.mxu0 0
    %815 = vmatprep.subr.bf16.mxu0 0
    %816 = vmatpush1.bf16.xpose.msra.mxu0 0
    %817 = vmatprep.mubr.bf16.mxu0 0
    %818 = vmatmul.mubr.bf16.gmra.mrb[0].mxu0 %v780
    %v819 = vpop.f32.mrb[0].mxu0
    %v820 = vadd.f32 0.0, %v819
    %v821 = vpop.f32.mrb[0].mxu0
    %v822 = vpop.f32.mrb[0].mxu0
    %v823 = vadd.f32 0.0, %v822
    %v824 = vpop.f32.mrb[0].mxu0
    %825 = vdwg.mxu0
    %v826 = vmul.f32 %v820, 0.25
    %v827 = vmul.f32 %v823, 0.25
    %v828 = vadd.f32 %v826, %v21
    %v829 = vadd.f32 %v827, %v22
    %v830 = vsel %vm135, %v828, -inf
    %831 = vmax.xlane.f32.xlu0 %v830
    %v832 = vpop.xlane.xlu0 %831
    %v833 = vsel %vm135, %v829, -inf
    %834 = vmax.xlane.f32.xlu0 %v833
    %v835 = vpop.xlane.xlu0 %834
    %v836 = vsub.f32 %v828, %v832
    %v837 = vsub.f32 %v829, %v835
    %v838 = vmul.f32 %v836, 1.442695
    %v839 = vpow.pop %v838
    %v840 = vmul.f32 %v837, 1.442695
    %v841 = vpow.pop %v840
    %v842 = vsel %vm135, %v839, 0.0
    %843 = vadd.xlane.f32.xlu0 %v842
    %v844 = vpop.xlane.xlu0 %843
    %v845 = vsel %vm135, %v841, 0.0
    %846 = vadd.xlane.f32.xlu0 %v845
    %v847 = vpop.xlane.xlu0 %846
    %v848 = vrcp.pop %v844
    %v849 = vrcp.pop %v847
    %v850 = vmul.f32 %v839, %v848
    %v851 = vmul.f32 %v841, %v849
    %v852 = vpack.c.bf16 %v851, %v850
    %853 = vrot.lane.b32.xlu0 %v775, 64
    %v854 = vpop.permute.xlu0 %853
    %v857 = vsel %vm135, %v852, 0
    %859 = vmatprep.subr.bf16.mxu0 0
    %860 = vmatpush1.bf16.msra.mxu0 %v854
    %861 = vmatprep.subr.bf16.mxu0 0
    %862 = vmatpush1.bf16.msra.mxu0 0
    %863 = vmatprep.subr.bf16.mxu0 0
    %864 = vmatpush1.bf16.msra.mxu0 0
    %865 = vmatprep.subr.bf16.mxu0 0
    %866 = vmatpush1.bf16.msra.mxu0 0
    %867 = vmatprep.subr.bf16.mxu0 0
    %868 = vmatpush1.bf16.msra.mxu0 0
    %869 = vmatprep.subr.bf16.mxu0 0
    %870 = vmatpush1.bf16.msra.mxu0 0
    %871 = vmatprep.subr.bf16.mxu0 0
    %872 = vmatpush1.bf16.msra.mxu0 0
    %873 = vmatprep.subr.bf16.mxu0 0
    %874 = vmatpush1.bf16.msra.mxu0 0
    %875 = vmatprep.subr.bf16.mxu0 0
    %876 = vmatpush1.bf16.msra.mxu0 0
    %877 = vmatprep.subr.bf16.mxu0 0
    %878 = vmatpush1.bf16.msra.mxu0 0
    %879 = vmatprep.subr.bf16.mxu0 0
    %880 = vmatpush1.bf16.msra.mxu0 0
    %881 = vmatprep.subr.bf16.mxu0 0
    %882 = vmatpush1.bf16.msra.mxu0 0
    %883 = vmatprep.subr.bf16.mxu0 0
    %884 = vmatpush1.bf16.msra.mxu0 0
    %885 = vmatprep.subr.bf16.mxu0 0
    %886 = vmatpush1.bf16.msra.mxu0 0
    %887 = vmatprep.subr.bf16.mxu0 0
    %888 = vmatpush1.bf16.msra.mxu0 0
    %889 = vmatprep.subr.bf16.mxu0 0
    %890 = vmatpush1.bf16.msra.mxu0 0
    %891 = vmatprep.mubr.bf16.mxu0 0
    %892 = vmatmul.mubr.bf16.gmra.mrb[0].mxu0 %v857
    %v893 = vpop.f32.mrb[0].mxu0
    %v894 = vadd.f32 0.0, %v893
    %v895 = vpop.f32.mrb[0].mxu0
    %v896 = vpop.f32.mrb[0].mxu0
    %v897 = vadd.f32 0.0, %v896
    %v898 = vpop.f32.mrb[0].mxu0
    %899 = vdwg.mxu0
    %900 = vrot.lane.b32.xlu0 %v775, 112
    %v901 = vpop.permute.xlu0 %900
    %902 = vrot.lane.b32.xlu0 %v775, 80
    %v903 = vpop.permute.xlu0 %902
    %v905 = vsel %vm135, %v901, 0
    %v908 = vsel %vm135, %v903, 0
    %910 = vmatprep.subr.bf16.mxu0 0
    %911 = vmatpush1.bf16.xpose.msra.mxu0 %v908
    %912 = vmatprep.subr.bf16.mxu0 0
    %913 = vmatpush1.bf16.xpose.msra.mxu0 0
    %914 = vmatprep.subr.bf16.mxu0 0
    %915 = vmatpush1.bf16.xpose.msra.mxu0 0
    %916 = vmatprep.subr.bf16.mxu0 0
    %917 = vmatpush1.bf16.xpose.msra.mxu0 0
    %918 = vmatprep.subr.bf16.mxu0 0
    %919 = vmatpush1.bf16.xpose.msra.mxu0 0
    %920 = vmatprep.subr.bf16.mxu0 0
    %921 = vmatpush1.bf16.xpose.msra.mxu0 0
    %922 = vmatprep.subr.bf16.mxu0 0
    %923 = vmatpush1.bf16.xpose.msra.mxu0 0
    %924 = vmatprep.subr.bf16.mxu0 0
    %925 = vmatpush1.bf16.xpose.msra.mxu0 0
    %926 = vmatprep.subr.bf16.mxu0 0
    %927 = vmatpush1.bf16.xpose.msra.mxu0 0
    %928 = vmatprep.subr.bf16.mxu0 0
    %929 = vmatpush1.bf16.xpose.msra.mxu0 0
    %930 = vmatprep.subr.bf16.mxu0 0
    %931 = vmatpush1.bf16.xpose.msra.mxu0 0
    %932 = vmatprep.subr.bf16.mxu0 0
    %933 = vmatpush1.bf16.xpose.msra.mxu0 0
    %934 = vmatprep.subr.bf16.mxu0 0
    %935 = vmatpush1.bf16.xpose.msra.mxu0 0
    %936 = vmatprep.subr.bf16.mxu0 0
    %937 = vmatpush1.bf16.xpose.msra.mxu0 0
    %938 = vmatprep.subr.bf16.mxu0 0
    %939 = vmatpush1.bf16.xpose.msra.mxu0 0
    %940 = vmatprep.subr.bf16.mxu0 0
    %941 = vmatpush1.bf16.xpose.msra.mxu0 0
    %942 = vmatprep.mubr.bf16.mxu0 0
    %943 = vmatmul.mubr.bf16.gmra.mrb[0].mxu0 %v905
    %v944 = vpop.f32.mrb[0].mxu0
    %v945 = vadd.f32 0.0, %v944
    %v946 = vpop.f32.mrb[0].mxu0
    %v947 = vpop.f32.mrb[0].mxu0
    %v948 = vadd.f32 0.0, %v947
    %v949 = vpop.f32.mrb[0].mxu0
    %950 = vdwg.mxu0
    %v951 = vmul.f32 %v945, 0.25
    %v952 = vmul.f32 %v948, 0.25
    %v953 = vadd.f32 %v951, %v21
    %v954 = vadd.f32 %v952, %v22
    %v955 = vsel %vm135, %v953, -inf
    %956 = vmax.xlane.f32.xlu0 %v955
    %v957 = vpop.xlane.xlu0 %956
    %v958 = vsel %vm135, %v954, -inf
    %959 = vmax.xlane.f32.xlu0 %v958
    %v960 = vpop.xlane.xlu0 %959
    %v961 = vsub.f32 %v953, %v957
    %v962 = vsub.f32 %v954, %v960
    %v963 = vmul.f32 %v961, 1.442695
    %v964 = vpow.pop %v963
    %v965 = vmul.f32 %v962, 1.442695
    %v966 = vpow.pop %v965
    %v967 = vsel %vm135, %v964, 0.0
    %968 = vadd.xlane.f32.xlu0 %v967
    %v969 = vpop.xlane.xlu0 %968
    %v970 = vsel %vm135, %v966, 0.0
    %971 = vadd.xlane.f32.xlu0 %v970
    %v972 = vpop.xlane.xlu0 %971
    %v973 = vrcp.pop %v969
    %v974 = vrcp.pop %v972
    %v975 = vmul.f32 %v964, %v973
    %v976 = vmul.f32 %v966, %v974
    %v977 = vpack.c.bf16 %v976, %v975
    %978 = vrot.lane.b32.xlu0 %v775, 48
    %v979 = vpop.permute.xlu0 %978
    %v982 = vsel %vm135, %v977, 0
    %984 = vmatprep.subr.bf16.mxu0 0
    %985 = vmatpush1.bf16.msra.mxu0 %v979
    %986 = vmatprep.subr.bf16.mxu0 0
    %987 = vmatpush1.bf16.msra.mxu0 0
    %988 = vmatprep.subr.bf16.mxu0 0
    %989 = vmatpush1.bf16.msra.mxu0 0
    %990 = vmatprep.subr.bf16.mxu0 0
    %991 = vmatpush1.bf16.msra.mxu0 0
    %992 = vmatprep.subr.bf16.mxu0 0
    %993 = vmatpush1.bf16.msra.mxu0 0
    %994 = vmatprep.subr.bf16.mxu0 0
    %995 = vmatpush1.bf16.msra.mxu0 0
    %996 = vmatprep.subr.bf16.mxu0 0
    %997 = vmatpush1.bf16.msra.mxu0 0
    %998 = vmatprep.subr.bf16.mxu0 0
    %999 = vmatpush1.bf16.msra.mxu0 0
    %1000 = vmatprep.subr.bf16.mxu0 0
    %1001 = vmatpush1.bf16.msra.mxu0 0
    %1002 = vmatprep.subr.bf16.mxu0 0
    %1003 = vmatpush1.bf16.msra.mxu0 0
    %1004 = vmatprep.subr.bf16.mxu0 0
    %1005 = vmatpush1.bf16.msra.mxu0 0
    %1006 = vmatprep.subr.bf16.mxu0 0
    %1007 = vmatpush1.bf16.msra.mxu0 0
    %1008 = vmatprep.subr.bf16.mxu0 0
    %1009 = vmatpush1.bf16.msra.mxu0 0
    %1010 = vmatprep.subr.bf16.mxu0 0
    %1011 = vmatpush1.bf16.msra.mxu0 0
    %1012 = vmatprep.subr.bf16.mxu0 0
    %1013 = vmatpush1.bf16.msra.mxu0 0
    %1014 = vmatprep.subr.bf16.mxu0 0
    %1015 = vmatpush1.bf16.msra.mxu0 0
    %1016 = vmatprep.mubr.bf16.mxu0 0
    %1017 = vmatmul.mubr.bf16.gmra.mrb[0].mxu0 %v982
    %v1018 = vpop.f32.mrb[0].mxu0
    %v1019 = vadd.f32 0.0, %v1018
    %v1020 = vpop.f32.mrb[0].mxu0
    %v1021 = vpop.f32.mrb[0].mxu0
    %v1022 = vadd.f32 0.0, %v1021
    %v1023 = vpop.f32.mrb[0].mxu0
    %1024 = vdwg.mxu0
    %1027 = vrot.lane.b32.xlu0 %v1019, 16
    %v1028 = vpop.permute.xlu0 %1027
    %1029 = vrot.lane.b32.xlu0 %v1022, 16
    %v1030 = vpop.permute.xlu0 %1029
    %v1033 = vsel %vm135, %v894, %v1028
    %v1034 = vsel %vm135, %v897, %v1030
    %v1035 = vpack.c.bf16 %v1034, %v1033
    %v1036 = vld [vmem:[%s2 + $0x60] sm:$0xf]
    %v1037 = vld [vmem:[%s2 + $0x64] sm:$0xf]
    %v1038 = vld [vmem:[%s2 + $0x68] sm:$0xf]
    %v1039 = vld [vmem:[%s2 + $0x6c] sm:$0xf]
    %v1040 = vld [vmem:[%s3 + $0xb] sm:$0x1]
    %v1041 = vlaneseq
    %v1042 = vshrl.u32 %v1041, 7
    %v1043 = vsub.s32 0, %v1042
    %v1044 = vrot.slane %v1040, %v1043
    %v1049 = vunpack.c.l.b16 %v1036
    %v1050 = vunpack.c.l.b16 %v1037
    %v1051 = vunpack.c.l.b16 %v1038
    %v1052 = vunpack.c.l.b16 %v1039
    %v1053 = vpack.c.b16 %v1050, %v1049
    %v1054 = vpack.c.b16 %v1052, %v1051
    %v1058 = vsel %vm25, %v1035, 0
    %1060 = vmatprep.subr.bf16.mxu0 0
    %1061 = vmatpush1.bf16.msra.mxu0 %v1053
    %1062 = vmatprep.subr.bf16.mxu0 0
    %1063 = vmatpush1.bf16.msra.mxu0 %v1054
    %1064 = vmatprep.subr.bf16.mxu0 0
    %1065 = vmatpush1.bf16.msra.mxu0 0
    %1066 = vmatprep.subr.bf16.mxu0 0
    %1067 = vmatpush1.bf16.msra.mxu0 0
    %1068 = vmatprep.subr.bf16.mxu0 0
    %1069 = vmatpush1.bf16.msra.mxu0 0
    %1070 = vmatprep.subr.bf16.mxu0 0
    %1071 = vmatpush1.bf16.msra.mxu0 0
    %1072 = vmatprep.subr.bf16.mxu0 0
    %1073 = vmatpush1.bf16.msra.mxu0 0
    %1074 = vmatprep.subr.bf16.mxu0 0
    %1075 = vmatpush1.bf16.msra.mxu0 0
    %1076 = vmatprep.subr.bf16.mxu0 0
    %1077 = vmatpush1.bf16.msra.mxu0 0
    %1078 = vmatprep.subr.bf16.mxu0 0
    %1079 = vmatpush1.bf16.msra.mxu0 0
    %1080 = vmatprep.subr.bf16.mxu0 0
    %1081 = vmatpush1.bf16.msra.mxu0 0
    %1082 = vmatprep.subr.bf16.mxu0 0
    %1083 = vmatpush1.bf16.msra.mxu0 0
    %1084 = vmatprep.subr.bf16.mxu0 0
    %1085 = vmatpush1.bf16.msra.mxu0 0
    %1086 = vmatprep.subr.bf16.mxu0 0
    %1087 = vmatpush1.bf16.msra.mxu0 0
    %1088 = vmatprep.subr.bf16.mxu0 0
    %1089 = vmatpush1.bf16.msra.mxu0 0
    %1090 = vmatprep.subr.bf16.mxu0 0
    %1091 = vmatpush1.bf16.msra.mxu0 0
    %1092 = vmatprep.mubr.bf16.mxu0 0
    %1093 = vmatmul.mubr.bf16.gmra.mrb[0].mxu0 %v1058
    %v1094 = vpop.f32.mrb[0].mxu0
    %v1095 = vadd.f32 %v1044, %v1094
    %v1096 = vpop.f32.mrb[0].mxu0
    %v1097 = vpop.f32.mrb[0].mxu0
    %v1098 = vadd.f32 %v1044, %v1097
    %v1099 = vpop.f32.mrb[0].mxu0
    %1100 = vdwg.mxu0
    %v1101 = vadd.f32 %v1095, %v707
    %v1102 = vadd.f32 %v1098, %v708
    %v1103 = vld [vmem:[%s3 + $0xc] sm:$0x1]
    %v1104 = vld [vmem:[%s3 + $0xd] sm:$0x1]
    %v1105 = vsel %vm25, %v1101, 0.0
    %1106 = vadd.xlane.f32.xlu0 %v1105
    %v1107 = vpop.xlane.xlu0 %1106
    %v1108 = vsel %vm25, %v1102, 0.0
    %1109 = vadd.xlane.f32.xlu0 %v1108
    %v1110 = vpop.xlane.xlu0 %1109
    %v1111 = vmul.f32 %v1107, %v32
    %v1112 = vmul.f32 %v1110, %v32
    %v1113 = vsub.f32 %v1101, %v1111
    %v1114 = vsub.f32 %v1102, %v1112
    %v1115 = vmul.f32 %v1113, %v1113
    %v1116 = vmul.f32 %v1114, %v1114
    %v1117 = vsel %vm25, %v1115, 0.0
    %1118 = vadd.xlane.f32.xlu0 %v1117
    %v1119 = vpop.xlane.xlu0 %1118
    %v1120 = vsel %vm25, %v1116, 0.0
    %1121 = vadd.xlane.f32.xlu0 %v1120
    %v1122 = vpop.xlane.xlu0 %1121
    %v1123 = vmul.f32 %v1119, %v32
    %v1124 = vmul.f32 %v1122, %v32
    %v1125 = vadd.f32 %v1123, 1e-12
    %v1126 = vadd.f32 %v1124, 1e-12
    %v1127 = vrsqrt.pop %v1125
    %v1128 = vrsqrt.pop %v1126
    %v1129 = vmul.f32 %v1113, %v1127
    %v1130 = vmul.f32 %v1114, %v1128
    %v1131 = vlaneseq
    %v1132 = vshrl.u32 %v1131, 7
    %v1133 = vsub.s32 0, %v1132
    %v1134 = vrot.slane %v1103, %v1133
    %v1135 = vmul.f32 %v1129, %v1134
    %v1136 = vmul.f32 %v1130, %v1134
    %v1137 = vlaneseq
    %v1138 = vshrl.u32 %v1137, 7
    %v1139 = vsub.s32 0, %v1138
    %v1140 = vrot.slane %v1104, %v1139
    %v1141 = vadd.f32 %v1135, %v1140
    %v1142 = vadd.f32 %v1136, %v1140
    %v1143 = vpack.c.bf16 %v1142, %v1141
    %v1144 = vld [vmem:[%s2 + $0x70] sm:$0xf]
    %v1145 = vld [vmem:[%s2 + $0x74] sm:$0xf]
    %v1146 = vld [vmem:[%s2 + $0x78] sm:$0xf]
    %v1147 = vld [vmem:[%s2 + $0x7c] sm:$0xf]
    %v1148 = vld [vmem:[%s3 + $0xe] sm:$0x1]
    %v1149 = vlaneseq
    %v1150 = vshrl.u32 %v1149, 7
    %v1151 = vsub.s32 0, %v1150
    %v1152 = vrot.slane %v1148, %v1151
    %v1157 = vunpack.c.l.b16 %v1144
    %v1158 = vunpack.c.l.b16 %v1145
    %v1159 = vunpack.c.l.b16 %v1146
    %v1160 = vunpack.c.l.b16 %v1147
    %v1161 = vpack.c.b16 %v1158, %v1157
    %v1162 = vpack.c.b16 %v1160, %v1159
    %v1166 = vsel %vm25, %v1143, 0
    %1168 = vmatprep.subr.bf16.mxu0 0
    %1169 = vmatpush1.bf16.msra.mxu0 %v1161
    %1170 = vmatprep.subr.bf16.mxu0 0
    %1171 = vmatpush1.bf16.msra.mxu0 %v1162
    %1172 = vmatprep.subr.bf16.mxu0 0
    %1173 = vmatpush1.bf16.msra.mxu0 0
    %1174 = vmatprep.subr.bf16.mxu0 0
    %1175 = vmatpush1.bf16.msra.mxu0 0
    %1176 = vmatprep.subr.bf16.mxu0 0
    %1177 = vmatpush1.bf16.msra.mxu0 0
    %1178 = vmatprep.subr.bf16.mxu0 0
    %1179 = vmatpush1.bf16.msra.mxu0 0
    %1180 = vmatprep.subr.bf16.mxu0 0
    %1181 = vmatpush1.bf16.msra.mxu0 0
    %1182 = vmatprep.subr.bf16.mxu0 0
    %1183 = vmatpush1.bf16.msra.mxu0 0
    %1184 = vmatprep.subr.bf16.mxu0 0
    %1185 = vmatpush1.bf16.msra.mxu0 0
    %1186 = vmatprep.subr.bf16.mxu0 0
    %1187 = vmatpush1.bf16.msra.mxu0 0
    %1188 = vmatprep.subr.bf16.mxu0 0
    %1189 = vmatpush1.bf16.msra.mxu0 0
    %1190 = vmatprep.subr.bf16.mxu0 0
    %1191 = vmatpush1.bf16.msra.mxu0 0
    %1192 = vmatprep.subr.bf16.mxu0 0
    %1193 = vmatpush1.bf16.msra.mxu0 0
    %1194 = vmatprep.subr.bf16.mxu0 0
    %1195 = vmatpush1.bf16.msra.mxu0 0
    %1196 = vmatprep.subr.bf16.mxu0 0
    %1197 = vmatpush1.bf16.msra.mxu0 0
    %1198 = vmatprep.subr.bf16.mxu0 0
    %1199 = vmatpush1.bf16.msra.mxu0 0
    %1200 = vmatprep.mubr.bf16.mxu0 0
    %1201 = vmatmul.mubr.bf16.gmra.mrb[0].mxu0 %v1166
    %v1202 = vpop.f32.mrb[0].mxu0
    %v1203 = vadd.f32 %v1152, %v1202
    %v1204 = vpop.f32.mrb[0].mxu0
    %v1205 = vpop.f32.mrb[0].mxu0
    %v1206 = vadd.f32 %v1152, %v1205
    %v1207 = vpop.f32.mrb[0].mxu0
    %1208 = vdwg.mxu0
    %v1209 = vmul.f32 %v1203, 0.5
    %v1210 = vmul.f32 %v1206, 0.5
    %v1211 = vmul.f32 %v1203, 0.044715
    %v1212 = vmul.f32 %v1206, 0.044715
    %v1213 = vmul.f32 %v1211, %v1203
    %v1214 = vmul.f32 %v1212, %v1206
    %v1215 = vmul.f32 %v1213, %v1203
    %v1216 = vmul.f32 %v1214, %v1206
    %v1217 = vadd.f32 %v1203, %v1215
    %v1218 = vadd.f32 %v1206, %v1216
    %v1219 = vmul.f32 %v1217, 0.7978846
    %v1220 = vmul.f32 %v1218, 0.7978846
    %v1221 = vtanh.pop %v1219
    %v1222 = vtanh.pop %v1220
    %v1223 = vadd.f32 %v1221, 1.0
    %v1224 = vadd.f32 %v1222, 1.0
    %v1225 = vmul.f32 %v1209, %v1223
    %v1226 = vmul.f32 %v1210, %v1224
    %v1227 = vpack.c.bf16 %v1226, %v1225
    %v1228 = vld [vmem:[%s2 + $0x80] sm:$0xf]
    %v1229 = vld [vmem:[%s2 + $0x84] sm:$0xf]
    %v1230 = vld [vmem:[%s2 + $0x88] sm:$0xf]
    %v1231 = vld [vmem:[%s2 + $0x8c] sm:$0xf]
    %v1232 = vld [vmem:[%s2 + $0x90] sm:$0xf]
    %v1233 = vld [vmem:[%s2 + $0x94] sm:$0xf]
    %v1234 = vld [vmem:[%s2 + $0x98] sm:$0xf]
    %v1235 = vld [vmem:[%s2 + $0x9c] sm:$0xf]
    %v1236 = vld [vmem:[%s3 + $0xf] sm:$0x1]
    %v1237 = vlaneseq
    %v1238 = vshrl.u32 %v1237, 7
    %v1239 = vsub.s32 0, %v1238
    %v1240 = vrot.slane %v1236, %v1239
    %v1249 = vunpack.c.l.b16 %v1228
    %v1250 = vunpack.c.l.b16 %v1229
    %v1251 = vunpack.c.l.b16 %v1230
    %v1252 = vunpack.c.l.b16 %v1231
    %v1253 = vunpack.c.l.b16 %v1232
    %v1254 = vunpack.c.l.b16 %v1233
    %v1255 = vunpack.c.l.b16 %v1234
    %v1256 = vunpack.c.l.b16 %v1235
    %v1257 = vpack.c.b16 %v1250, %v1249
    %v1258 = vpack.c.b16 %v1252, %v1251
    %v1259 = vpack.c.b16 %v1254, %v1253
    %v1260 = vpack.c.b16 %v1256, %v1255
    %v1266 = vsel %vm622, %v1227, 0
    %1268 = vmatprep.subr.bf16.mxu0 0
    %1269 = vmatpush1.bf16.msra.mxu0 %v1257
    %1270 = vmatprep.subr.bf16.mxu0 0
    %1271 = vmatpush1.bf16.msra.mxu0 %v1258
    %1272 = vmatprep.subr.bf16.mxu0 0
    %1273 = vmatpush1.bf16.msra.mxu0 %v1259
    %1274 = vmatprep.subr.bf16.mxu0 0
    %1275 = vmatpush1.bf16.msra.mxu0 %v1260
    %1276 = vmatprep.subr.bf16.mxu0 0
    %1277 = vmatpush1.bf16.msra.mxu0 0
    %1278 = vmatprep.subr.bf16.mxu0 0
    %1279 = vmatpush1.bf16.msra.mxu0 0
    %1280 = vmatprep.subr.bf16.mxu0 0
    %1281 = vmatpush1.bf16.msra.mxu0 0
    %1282 = vmatprep.subr.bf16.mxu0 0
    %1283 = vmatpush1.bf16.msra.mxu0 0
    %1284 = vmatprep.subr.bf16.mxu0 0
    %1285 = vmatpush1.bf16.msra.mxu0 0
    %1286 = vmatprep.subr.bf16.mxu0 0
    %1287 = vmatpush1.bf16.msra.mxu0 0
    %1288 = vmatprep.subr.bf16.mxu0 0
    %1289 = vmatpush1.bf16.msra.mxu0 0
    %1290 = vmatprep.subr.bf16.mxu0 0
    %1291 = vmatpush1.bf16.msra.mxu0 0
    %1292 = vmatprep.subr.bf16.mxu0 0
    %1293 = vmatpush1.bf16.msra.mxu0 0
    %1294 = vmatprep.subr.bf16.mxu0 0
    %1295 = vmatpush1.bf16.msra.mxu0 0
    %1296 = vmatprep.subr.bf16.mxu0 0
    %1297 = vmatpush1.bf16.msra.mxu0 0
    %1298 = vmatprep.subr.bf16.mxu0 0
    %1299 = vmatpush1.bf16.msra.mxu0 0
    %1300 = vmatprep.mubr.bf16.mxu0 0
    %1301 = vmatmul.mubr.bf16.gmra.mrb[0].mxu0 %v1266
    %v1302 = vpop.f32.mrb[0].mxu0
    %v1303 = vadd.f32 %v1240, %v1302
    %v1304 = vpop.f32.mrb[0].mxu0
    %v1305 = vpop.f32.mrb[0].mxu0
    %v1306 = vadd.f32 %v1240, %v1305
    %v1307 = vpop.f32.mrb[0].mxu0
    %1308 = vdwg.mxu0
    %v1309 = vadd.f32 %v1303, %v1141
    %v1310 = vadd.f32 %v1306, %v1142
    %v1311 = vld [vmem:[%s3 + $0x10] sm:$0x1]
    %v1312 = vld [vmem:[%s3 + $0x11] sm:$0x1]
    %v1313 = vsel %vm25, %v1309, 0.0
    %1314 = vadd.xlane.f32.xlu0 %v1313
    %v1315 = vpop.xlane.xlu0 %1314
    %v1316 = vsel %vm25, %v1310, 0.0
    %1317 = vadd.xlane.f32.xlu0 %v1316
    %v1318 = vpop.xlane.xlu0 %1317
    %v1319 = vmul.f32 %v1315, %v32
    %v1320 = vmul.f32 %v1318, %v32
    %v1321 = vsub.f32 %v1309, %v1319
    %v1322 = vsub.f32 %v1310, %v1320
    %v1323 = vmul.f32 %v1321, %v1321
    %v1324 = vmul.f32 %v1322, %v1322
    %v1325 = vsel %vm25, %v1323, 0.0
    %1326 = vadd.xlane.f32.xlu0 %v1325
    %v1327 = vpop.xlane.xlu0 %1326
    %v1328 = vsel %vm25, %v1324, 0.0
    %1329 = vadd.xlane.f32.xlu0 %v1328
    %v1330 = vpop.xlane.xlu0 %1329
    %v1331 = vmul.f32 %v1327, %v32
    %v1332 = vmul.f32 %v1330, %v32
    %v1333 = vadd.f32 %v1331, 1e-12
    %v1334 = vadd.f32 %v1332, 1e-12
    %v1335 = vrsqrt.pop %v1333
    %v1336 = vrsqrt.pop %v1334
    %v1337 = vmul.f32 %v1321, %v1335
    %v1338 = vmul.f32 %v1322, %v1336
    %v1339 = vlaneseq
    %v1340 = vshrl.u32 %v1339, 7
    %v1341 = vsub.s32 0, %v1340
    %v1342 = vrot.slane %v1311, %v1341
    %v1343 = vmul.f32 %v1337, %v1342
    %v1344 = vmul.f32 %v1338, %v1342
    %v1345 = vlaneseq
    %v1346 = vshrl.u32 %v1345, 7
    %v1347 = vsub.s32 0, %v1346
    %v1348 = vrot.slane %v1312, %v1347
    %v1349 = vadd.f32 %v1343, %v1348
    %v1350 = vadd.f32 %v1344, %v1348
    %v1352 = vrot.slane %v1350, 7
    %vm1354 = vcmask 1040384
    %v1355 = vsel %vm1354, %v1349, %v1352
    %v1356 = vpack.c.bf16 %v1355, %v1355
    %v1357 = vld [vmem:[%s2 + $0xa0] sm:$0xf]
    %v1358 = vld [vmem:[%s2 + $0xa4] sm:$0xf]
    %v1359 = vld [vmem:[%s2 + $0xa8] sm:$0xf]
    %v1360 = vld [vmem:[%s2 + $0xac] sm:$0xf]
    %v1361 = vld [vmem:[%s3 + $0x12] sm:$0x1]
    %v1362 = vlaneseq
    %v1363 = vshrl.u32 %v1362, 7
    %v1364 = vsub.s32 0, %v1363
    %v1365 = vrot.slane %v1361, %v1364
    %v1370 = vunpack.c.l.b16 %v1357
    %v1371 = vunpack.c.l.b16 %v1358
    %v1372 = vunpack.c.l.b16 %v1359
    %v1373 = vunpack.c.l.b16 %v1360
    %v1374 = vpack.c.b16 %v1371, %v1370
    %v1375 = vpack.c.b16 %v1373, %v1372
    %v1379 = vsel %vm25, %v1356, 0
    %1381 = vmatprep.subr.bf16.mxu0 0
    %1382 = vmatpush1.bf16.msra.mxu0 %v1374
    %1383 = vmatprep.subr.bf16.mxu0 0
    %1384 = vmatpush1.bf16.msra.mxu0 %v1375
    %1385 = vmatprep.subr.bf16.mxu0 0
    %1386 = vmatpush1.bf16.msra.mxu0 0
    %1387 = vmatprep.subr.bf16.mxu0 0
    %1388 = vmatpush1.bf16.msra.mxu0 0
    %1389 = vmatprep.subr.bf16.mxu0 0
    %1390 = vmatpush1.bf16.msra.mxu0 0
    %1391 = vmatprep.subr.bf16.mxu0 0
    %1392 = vmatpush1.bf16.msra.mxu0 0
    %1393 = vmatprep.subr.bf16.mxu0 0
    %1394 = vmatpush1.bf16.msra.mxu0 0
    %1395 = vmatprep.subr.bf16.mxu0 0
    %1396 = vmatpush1.bf16.msra.mxu0 0
    %1397 = vmatprep.subr.bf16.mxu0 0
    %1398 = vmatpush1.bf16.msra.mxu0 0
    %1399 = vmatprep.subr.bf16.mxu0 0
    %1400 = vmatpush1.bf16.msra.mxu0 0
    %1401 = vmatprep.subr.bf16.mxu0 0
    %1402 = vmatpush1.bf16.msra.mxu0 0
    %1403 = vmatprep.subr.bf16.mxu0 0
    %1404 = vmatpush1.bf16.msra.mxu0 0
    %1405 = vmatprep.subr.bf16.mxu0 0
    %1406 = vmatpush1.bf16.msra.mxu0 0
    %1407 = vmatprep.subr.bf16.mxu0 0
    %1408 = vmatpush1.bf16.msra.mxu0 0
    %1409 = vmatprep.subr.bf16.mxu0 0
    %1410 = vmatpush1.bf16.msra.mxu0 0
    %1411 = vmatprep.subr.bf16.mxu0 0
    %1412 = vmatpush1.bf16.msra.mxu0 0
    %1413 = vmatprep.mubr.bf16.mxu0 0
    %1414 = vmatmul.mubr.bf16.gmra.mrb[0].mxu0 %v1379
    %v1415 = vpop.f32.mrb[0].mxu0
    %v1416 = vadd.f32 %v1365, %v1415
    %v1417 = vpop.f32.mrb[0].mxu0
    %v1418 = vpop.f32.mrb[0].mxu0
    %v1419 = vpop.f32.mrb[0].mxu0
    %1420 = vdwg.mxu0
    %v1421 = vtanh.pop %v1416
    %v1422 = vpack.c.bf16 %v1421, %v1421
    %v1423 = vld [vmem:[%s2 + $0xb0] sm:$0xf]
    %v1424 = vld [vmem:[%s2 + $0xb4] sm:$0xf]
    %v1425 = vld [vmem:[%s2 + $0xb8] sm:$0xf]
    %v1426 = vld [vmem:[%s2 + $0xbc] sm:$0xf]
    %v1427 = vld [vmem:[%s3 + $0x13] sm:$0x1]
    %v1428 = vlaneseq
    %v1429 = vshrl.u32 %v1428, 7
    %v1430 = vsub.s32 0, %v1429
    %v1431 = vrot.slane %v1427, %v1430
    %v1436 = vunpack.c.l.b16 %v1423
    %v1437 = vunpack.c.l.b16 %v1424
    %v1438 = vunpack.c.l.b16 %v1425
    %v1439 = vunpack.c.l.b16 %v1426
    %v1440 = vpack.c.b16 %v1437, %v1436
    %v1441 = vpack.c.b16 %v1439, %v1438
    %v1445 = vsel %vm25, %v1422, 0
    %1447 = vmatprep.subr.bf16.mxu0 0
    %1448 = vmatpush1.bf16.msra.mxu0 %v1440
    %1449 = vmatprep.subr.bf16.mxu0 0
    %1450 = vmatpush1.bf16.msra.mxu0 %v1441
    %1451 = vmatprep.subr.bf16.mxu0 0
    %1452 = vmatpush1.bf16.msra.mxu0 0
    %1453 = vmatprep.subr.bf16.mxu0 0
    %1454 = vmatpush1.bf16.msra.mxu0 0
    %1455 = vmatprep.subr.bf16.mxu0 0
    %1456 = vmatpush1.bf16.msra.mxu0 0
    %1457 = vmatprep.subr.bf16.mxu0 0
    %1458 = vmatpush1.bf16.msra.mxu0 0
    %1459 = vmatprep.subr.bf16.mxu0 0
    %1460 = vmatpush1.bf16.msra.mxu0 0
    %1461 = vmatprep.subr.bf16.mxu0 0
    %1462 = vmatpush1.bf16.msra.mxu0 0
    %1463 = vmatprep.subr.bf16.mxu0 0
    %1464 = vmatpush1.bf16.msra.mxu0 0
    %1465 = vmatprep.subr.bf16.mxu0 0
    %1466 = vmatpush1.bf16.msra.mxu0 0
    %1467 = vmatprep.subr.bf16.mxu0 0
    %1468 = vmatpush1.bf16.msra.mxu0 0
    %1469 = vmatprep.subr.bf16.mxu0 0
    %1470 = vmatpush1.bf16.msra.mxu0 0
    %1471 = vmatprep.subr.bf16.mxu0 0
    %1472 = vmatpush1.bf16.msra.mxu0 0
    %1473 = vmatprep.subr.bf16.mxu0 0
    %1474 = vmatpush1.bf16.msra.mxu0 0
    %1475 = vmatprep.subr.bf16.mxu0 0
    %1476 = vmatpush1.bf16.msra.mxu0 0
    %1477 = vmatprep.subr.bf16.mxu0 0
    %1478 = vmatpush1.bf16.msra.mxu0 0
    %1479 = vmatprep.mubr.bf16.mxu0 0
    %1480 = vmatmul.mubr.bf16.gmra.mrb[0].mxu0 %v1445
    %v1481 = vpop.f32.mrb[0].mxu0
    %v1482 = vadd.f32 %v1431, %v1481
    %v1483 = vpop.f32.mrb[0].mxu0
    %v1484 = vpop.f32.mrb[0].mxu0
    %v1485 = vpop.f32.mrb[0].mxu0
    %1486 = vdwg.mxu0
    %1487 = vst [vmem:[#allocation2] sm:$0x3] %v1482
    // Predicated region
    $region18: #{entity_typing_forward.1} parent=1 // pred_check
      _
    $region19: #{entity_typing_forward.1} parent=1 // pred_check_branch
      %1489 = sbr.rel (0) target = $region21
    $region20: #{entity_typing_forward.1} parent=1 // pred_region
      %s1491 = ssub.s32 32, 32
      %1492 = vsyncadd [#allocation3], %s1491
      %s1494 = sshll.u32 [#allocation2], 4
      %s1495 = int_to_ptr.vmem [resolvable:$true] %s1494
      %1497 = dma.vmem_to_hbm [thread:$0]  %s1495, 32, %s4, [#allocation3]
    $region21: #{entity_typing_forward.1} parent=1 // pred_fallthru
      _
    // Predicated region
    $region22: #{entity_typing_forward.1} parent=1 // pred_check
      _
    $region23: #{entity_typing_forward.1} parent=1 // pred_check_branch
      %1499 = sbr.rel (0) target = $region25
    $region24: #{entity_typing_forward.1} parent=1 // pred_region
      %1500 = dma.done [#allocation3], 32
    $region25: #{entity_typing_forward.1} parent=1 // pred_fallthru
      _
    %1501 = vsyncpa [#allocation3], 1

</llo_original>
